<compile_context>
chip_gen: v7x
topology: tpu7x:2x2x1
jax: 0.10.0
libtpu: 0.0.40
codegen_flags: <defaults>
</compile_context>

<pallas_src>
import numpy as np
import jax
import jax.numpy as jnp
from jax.experimental import pallas as pl
from jax.experimental.pallas import tpu as pltpu

EPS = 1e-5  # torch LayerNorm / GroupNorm default eps

# Flip to True to run the MXU with bf16 operands (f32 accumulation).  Kept
# False by default so the kernel stays within 5e-4 of the f32 reference.
_MXU_BF16 = False


def _mxu(x):
    return x.astype(jnp.bfloat16) if _MXU_BF16 else x


def _dot_hi(a, b):
    # Host-side / reference dots: force true-f32 precision so the reference and
    # the precomputed slabs match torch f32 semantics (XLA default on TPU is
    # bf16 passes otherwise).
    return jnp.dot(a, b, precision=jax.lax.Precision.HIGHEST,
                   preferred_element_type=jnp.float32)


def _round_up(n, m):
    return (n + m - 1) // m * m


# --------------------------------------------------------------------------
# Pure-JAX reference (mirrors the torch module math; used for validation and
# for the parameter-only precomputation in the wrapper).
# --------------------------------------------------------------------------
def _layernorm(v, g, b):
    m = jnp.mean(v, axis=-1, keepdims=True)
    var = jnp.mean((v - m) ** 2, axis=-1, keepdims=True)
    return (v - m) * jax.lax.rsqrt(var + EPS) * g + b


def _sum_last3(v):
    s = jnp.sum(v, axis=3, keepdims=True)
    s = jnp.sum(s, axis=2, keepdims=True)
    s = jnp.sum(s, axis=1, keepdims=True)
    return s


def _trompt_cycle_compute(x, O, p):
    """One Trompt cycle (reference). x:(B,C), O:(B,P,d) -> (O_new, y:(B,1))."""
    B, C = x.shape
    P, d = O.shape[1], O.shape[2]

    # TromptEmbedding (numeric path)
    e = x[:, :, None] * p["w_num"][None] + p["b_num"][None]
    e = jnp.maximum(e, 0.0)
    E = _layernorm(e, p["g_enc"][0], p["b_enc"][0])                  # (B,C,d)

    # Expander: Linear(1,P) + ReLU + GroupNorm(2,P) + residual
    ew = p["exp_w"][0]
    eb = p["exp_b"][0]
    res = jnp.maximum(
        E[:, None, :, :] * ew[None, :, None, None] + eb[None, :, None, None],
        0.0)                                                         # (B,P,C,d)
    half = P // 2
    denom = float(half * C * d)
    parts = []
    for r in (res[:, :half], res[:, half:]):
        m = _sum_last3(r) / denom
        v = _sum_last3((r - m) ** 2) / denom
        parts.append((r - m) * jax.lax.rsqrt(v + EPS))
    res_n = jnp.concatenate(parts, axis=1)
    gn = (res_n * p["gn_w"][0][None, :, None, None]
          + p["gn_b"][0][None, :, None, None])
    x_res = E[:, None, :, :] + gn                                    # (B,P,C,d)

    # ImportanceGetter
    pn = _layernorm(p["pemb"], p["ln1_g"][0], p["ln1_b"][0])
    d1 = _dot_hi(pn, p["dw1"])
    d2 = _dot_hi(O.reshape(B * P, d), p["dw2"]).reshape(B, P, d)
    dense = d1[None] + d2 + p["dense_b"][0] + p["pemb"][None] + O
    cn = _layernorm(p["colemb"], p["ln2_g"][0], p["ln2_b"][0])
    scores = _dot_hi(dense.reshape(B * P, d), cn.T).reshape(B, P, C)
    scores = scores - jnp.max(scores, axis=-1, keepdims=True)
    es = jnp.exp(scores)
    M = es / jnp.sum(es, axis=-1, keepdims=True)

    # column-weighted sum
    o_new = jnp.sum(M[..., None] * x_res, axis=2)                    # (B,P,d)

    # TromptDownstream
    s = jnp.sum(o_new * p["l1_w"][0][None, None, :], axis=-1) + p["l1_b"][0, 0]
    s = s - jnp.max(s, axis=-1, keepdims=True)
    es2 = jnp.exp(s)
    pw = es2 / jnp.sum(es2, axis=-1, keepdims=True)
    xnew = jnp.sum(pw[..., None] * o_new, axis=1)
    h = jnp.maximum(_dot_hi(xnew, p["l2_w"]) + p["l2_b"][0], 0.0)
    hn = _layernorm(h, p["lnd_g"][0], p["lnd_b"][0])
    y = jnp.sum(hn * p["lf_w"][0][None, :], axis=-1, keepdims=True) + p["lf_b"][0, 0]
    return o_new, y


# --------------------------------------------------------------------------
# Fused Pallas kernel: one grid step == one Trompt cycle on one batch tile.
# --------------------------------------------------------------------------
def _trompt_fused_kernel(slab_ref, x_ref, init_ref, s_ref, r_ref, down_ref,
                         y_ref, o_ref):
    ci = pl.program_id(1)                    # cycle index (inner, "arbitrary")
    Bt, Cp = x_ref.shape                     # Cp = C padded to a multiple of 8
    P, d = init_ref.shape
    Cd = s_ref.shape[0]                      # C * d (lane-dense width)
    half = P // 2
    n_out = y_ref.shape[1]                   # n_cycles

    @pl.when(ci == 0)
    def _init_state():
        # O = init_rec broadcast over the batch tile; lives in VMEM scratch.
        o_ref[...] = jnp.broadcast_to(init_ref[...][None, :, :], (Bt, P, d))
        y_ref[...] = jnp.zeros_like(y_ref)

    # ---- unpack per-cycle parameter slab (static, 8-aligned row slices) ----
    r_ew, r_eb, r_gw, r_gb = 0, P, 2 * P, 3 * P
    r_sb = 4 * P
    r_weff = 5 * P
    r_wsel = 5 * P + d
    r_msc = r_wsel + Cp

    exp_w = slab_ref[r_ew:r_ew + P, :]        # (P, Cd)   lane-broadcast
    exp_b = slab_ref[r_eb:r_eb + P, :]
    gn_w = slab_ref[r_gw:r_gw + P, :]
    gn_b = slab_ref[r_gb:r_gb + P, :]
    scores_base = slab_ref[r_sb:r_sb + P, :]  # (P, Cd)   (LN(pemb)W1+b+pemb)@cn^T
    w_eff = slab_ref[r_weff:r_weff + d, :]    # (d, Cd)   (dw2 + I) @ cn^T
    w_sel = slab_ref[r_wsel:r_wsel + Cp, :]   # (Cp, Cd)  x-expansion * w_num
    b_num = slab_ref[r_msc:r_msc + 1, :]      # (1, Cd)
    g_enc = slab_ref[r_msc + 1:r_msc + 2, :]  # LN scale tiled over C chunks
    b_enc = slab_ref[r_msc + 2:r_msc + 3, :]

    # ---- TromptEmbedding (numeric path), lane-dense (Bt, Cd) ----
    # x expansion + w_num multiply fused into one tiny MXU matmul.
    e = jnp.maximum(
        jnp.dot(_mxu(x_ref[...]), _mxu(w_sel),
                preferred_element_type=jnp.float32) + b_num, 0.0)    # (Bt, Cd)
    seg = s_ref[...]                                                 # (Cd, Cd)
    inv_d = 1.0 / float(d)
    mean = jnp.dot(_mxu(e), _mxu(seg), preferred_element_type=jnp.float32) * inv_d
    msq = jnp.dot(_mxu(e * e), _mxu(seg), preferred_element_type=jnp.float32) * inv_d
    var = msq - mean * mean
    emb = (e - mean) * jax.lax.rsqrt(var + EPS) * g_enc + b_enc      # (Bt, Cd)

    # ---- Expander: Linear(1,P) + ReLU + GroupNorm(2,P) + residual ----
    res = jnp.maximum(emb[:, None, :] * exp_w[None] + exp_b[None], 0.0)  # (Bt,P,Cd)
    row_s = jnp.sum(res, axis=2, keepdims=True)                      # (Bt, P, 1)
    row_q = jnp.sum(res * res, axis=2, keepdims=True)
    gdenom = 1.0 / float(half * Cd)
    m0 = jnp.sum(row_s[:, :half, :], axis=1, keepdims=True) * gdenom
    m1 = jnp.sum(row_s[:, half:, :], axis=1, keepdims=True) * gdenom
    q0 = jnp.sum(row_q[:, :half, :], axis=1, keepdims=True) * gdenom
    q1 = jnp.sum(row_q[:, half:, :], axis=1, keepdims=True) * gdenom
    p_idx = jax.lax.broadcasted_iota(jnp.int32, (1, P, 1), 1)
    g_mean = jnp.where(p_idx < half, m0, m1)                         # (Bt, P, 1)
    g_var = jnp.where(p_idx < half, q0 - m0 * m0, q1 - m1 * m1)
    gn = (res - g_mean) * jax.lax.rsqrt(g_var + EPS) * gn_w[None] + gn_b[None]
    x_res = emb[:, None, :] + gn                                     # (Bt, P, Cd)

    # ---- ImportanceGetter (fully fused): scores = O @ W_eff + scores_base ----
    o_cur = o_ref[...]                                               # (Bt, P, d)
    o2 = o_cur.reshape(Bt * P, d)
    scores = (jnp.dot(_mxu(o2), _mxu(w_eff), preferred_element_type=jnp.float32)
              .reshape(Bt, P, Cd) + scores_base[None])               # (Bt, P, Cd)
    mx = jnp.max(scores, axis=-1, keepdims=True)
    ex = jnp.exp(scores - mx)
    inv_sum = pl.reciprocal(jnp.sum(ex, axis=-1, keepdims=True), approx=False)
    m_full = ex * (float(d) * inv_sum)       # softmax over C columns, repeated d times

    # ---- column-weighted sum: o_new[b,p,:] = sum_c M[b,p,c] * x_res[b,p,c,:] ----
    prod = m_full * x_res                                            # (Bt, P, Cd)
    o_new = jnp.dot(_mxu(prod.reshape(Bt * P, Cd)), _mxu(r_ref[...]),
                    preferred_element_type=jnp.float32).reshape(Bt, P, d)
    o_ref[...] = o_new                                               # carry to next cycle

    # ---- TromptDownstream ----
    l2_w = down_ref[0:d, :]                                          # (d, d)
    l1_w = down_ref[d:d + 1, :]                                      # (1, d)
    l2_b = down_ref[d + 1:d + 2, :]
    lnd_g = down_ref[d + 2:d + 3, :]
    lnd_b = down_ref[d + 3:d + 4, :]
    lf_w = down_ref[d + 4:d + 5, :]
    l1_b = down_ref[d + 5:d + 6, 0:1]                                # (1, 1)
    lf_b = down_ref[d + 6:d + 7, 0:1]                                # (1, 1)

    s = jnp.sum(o_new * l1_w[None], axis=-1, keepdims=True) + l1_b   # (Bt, P, 1)
    s = s - jnp.max(s, axis=1, keepdims=True)
    es = jnp.exp(s)
    pw = es * pl.reciprocal(jnp.sum(es, axis=1, keepdims=True), approx=False)
    xnew = jnp.sum(pw * o_new, axis=1)                               # (Bt, d)
    h = jnp.maximum(
        jnp.dot(_mxu(xnew), _mxu(l2_w), preferred_element_type=jnp.float32)
        + l2_b, 0.0)
    hm = jnp.mean(h, axis=-1, keepdims=True)
    hv = jnp.mean((h - hm) ** 2, axis=-1, keepdims=True)
    hn = (h - hm) * jax.lax.rsqrt(hv + EPS) * lnd_g + lnd_b
    yv = jnp.sum(hn * lf_w, axis=-1, keepdims=True) + lf_b           # (Bt, 1)

    # lane-dense, cycle-resident output: write column ci, writeback once / tile
    cyc = jax.lax.broadcasted_iota(jnp.int32, (Bt, n_out), 1)
    y_ref[...] = jnp.where(cyc == ci, yv, y_ref[...])


# --------------------------------------------------------------------------
# Wrapper: parameter packing (incl. hoisted parameter-only math) + pallas_call.
# --------------------------------------------------------------------------
def _build_cycle_slab(cycle_params, C, P, d):
    Cd = C * d
    Cp = _round_up(C, 8)
    eye = jnp.eye(d, dtype=jnp.float32)
    sel = (jnp.arange(Cd)[None, :] // d ==
           jnp.arange(C)[:, None]).astype(jnp.float32)                # (C, Cd)
    slabs = []
    for cp in cycle_params:
        # parameter-only math hoisted out of the kernel (exact, f32)
        pn = _layernorm(cp["pemb"], cp["ln1_g"], cp["ln1_b"])             # (P, d)
        dense_base = _dot_hi(pn, cp["dw1"]) + cp["dense_b"] + cp["pemb"]  # (P, d)
        cn = _layernorm(cp["colemb"], cp["ln2_g"], cp["ln2_b"])           # (C, d)
        cn_te = jnp.repeat(cn.T, d, axis=1)                               # (d, Cd)
        w_eff = _dot_hi(cp["dw2"] + eye, cn_te)                           # (d, Cd)
        scores_base = _dot_hi(dense_base, cn_te)                          # (P, Cd)
        w_sel = sel * cp["w_num"].reshape(1, Cd)                          # (C, Cd)
        w_sel = jnp.concatenate(
            [w_sel, jnp.zeros((Cp - C, Cd), jnp.float32)], axis=0)        # (Cp, Cd)
        ew = jnp.broadcast_to(cp["exp_w"].reshape(P, 1), (P, Cd))
        eb = jnp.broadcast_to(cp["exp_b"].reshape(P, 1), (P, Cd))
        gw = jnp.broadcast_to(cp["gn_w"].reshape(P, 1), (P, Cd))
        gb = jnp.broadcast_to(cp["gn_b"].reshape(P, 1), (P, Cd))
        misc = jnp.concatenate([
            cp["b_num"].reshape(1, Cd),
            jnp.tile(cp["g_enc"], (1, C)),
            jnp.tile(cp["b_enc"], (1, C)),
            jnp.zeros((5, Cd), jnp.float32),
        ], axis=0)                                                        # (8, Cd)
        slabs.append(jnp.concatenate(
            [ew, eb, gw, gb, scores_base, w_eff, w_sel, misc],
            axis=0).astype(jnp.float32))                                  # (5P+d+Cp+8, Cd)
    return jnp.stack(slabs)


def _build_down_slab(dp, d):
    def scal_row(v):
        return jnp.concatenate([v.reshape(1, 1),
                                jnp.zeros((1, d - 1), jnp.float32)], axis=1)
    return jnp.concatenate([
        dp["l2_w"], dp["l1_w"], dp["l2_b"], dp["lnd_g"], dp["lnd_b"],
        dp["lf_w"], scal_row(dp["l1_b"]), scal_row(dp["lf_b"]),
        jnp.zeros((1, d), jnp.float32),
    ], axis=0).astype(jnp.float32)                                         # (d+8, d)


def _aux_matrices(C, d):
    Cd = C * d
    seg = np.arange(Cd) // d
    s_mat = (seg[:, None] == seg[None, :]).astype(np.float32)              # (Cd, Cd)
    r_mat = (np.arange(Cd)[:, None] % d ==
             np.arange(d)[None, :]).astype(np.float32)                     # (Cd, d)
    return jnp.asarray(s_mat), jnp.asarray(r_mat)


def _pick_batch_tile(B):
    # Megacore-aware policy: >= 2 batch tiles when there is enough work (so the
    # "parallel" axis shards across both TensorCores on v7x), 8-row aligned,
    # capped at 256 rows so one tile's live (b_tile, P, 128) f32 intermediates
    # stay well inside v7x's 64 MiB VMEM (and leave double-buffer headroom on
    # v5e/v6e).
    if B <= 8:
        return 8
    return min(256, _round_up(-(-B // 2), 8))


@jax.jit
def trompt_forward(x, init_rec, cycle_params, down_params):
    """Full Model.forward: x (B, C) -> (B, n_cycles)."""
    B, C = x.shape
    P, d = init_rec.shape
    Cd = C * d
    Cp = _round_up(C, 8)
    n_cycles = len(cycle_params)
    rows_a = 5 * P + d + Cp + 8
    rows_d = d + 8

    slab = _build_cycle_slab(cycle_params, C, P, d)                        # (n_cycles, rows_a, Cd)
    down_slab = _build_down_slab(down_params, d)                           # (rows_d, d)
    s_mat, r_mat = _aux_matrices(C, d)

    b_tile = _pick_batch_tile(B)
    n_b = pl.cdiv(B, b_tile)
    B_pad = n_b * b_tile
    xp = jnp.pad(x.astype(jnp.float32), ((0, B_pad - B), (0, Cp - C)))     # (B_pad, Cp)

    y = pl.pallas_call(
        _trompt_fused_kernel,
        grid=(n_b, n_cycles),
        in_specs=[
            pl.BlockSpec((None, rows_a, Cd), lambda bi, ci: (ci, 0, 0)),   # per-cycle slab
            pl.BlockSpec((b_tile, Cp), lambda bi, ci: (bi, 0)),            # x (padded)
            pl.BlockSpec((P, d), lambda bi, ci: (0, 0)),                   # init_rec
            pl.BlockSpec((Cd, Cd), lambda bi, ci: (0, 0)),                 # segment matrix
            pl.BlockSpec((Cd, d), lambda bi, ci: (0, 0)),                  # column-sum matrix
            pl.BlockSpec((rows_d, d), lambda bi, ci: (0, 0)),              # downstream slab
        ],
        out_specs=pl.BlockSpec((b_tile, n_cycles), lambda bi, ci: (bi, 0)),
        out_shape=jax.ShapeDtypeStruct((B_pad, n_cycles), jnp.float32),
        scratch_shapes=[pltpu.VMEM((b_tile, P, d), jnp.float32)],
        compiler_params=pltpu.CompilerParams(
            dimension_semantics=("parallel", "arbitrary"),
            vmem_limit_bytes=48 * 1024 * 1024),
    )(slab, xp, init_rec.astype(jnp.float32), s_mat, r_mat, down_slab)

    return y[:B]                                                           # (B, n_cycles)


# --------------------------------------------------------------------------
# Deterministic parameter construction + self-check.
# --------------------------------------------------------------------------
def _make_params(key, C, P, d, n_cycles):
    def nrm(k, shape, std=0.1):
        return (std * jax.random.normal(k, shape)).astype(jnp.float32)

    keys = iter(jax.random.split(key, 64 + 32 * n_cycles))
    init_rec = nrm(next(keys), (P, d), 0.01)
    cycle_params = []
    for _ in range(n_cycles):
        cp = {
            "w_num": nrm(next(keys), (C, d), 0.3),
            "b_num": nrm(next(keys), (C, d), 0.3),
            "g_enc": 1.0 + nrm(next(keys), (1, d), 0.05),
            "b_enc": nrm(next(keys), (1, d), 0.05),
            "exp_w": nrm(next(keys), (1, P), 0.5),   # Linear(1,P).weight
            "exp_b": nrm(next(keys), (1, P), 0.5),
            "gn_w": 1.0 + nrm(next(keys), (1, P), 0.05),
            "gn_b": nrm(next(keys), (1, P), 0.05),
            "pemb": nrm(next(keys), (P, d), 0.01),
            "colemb": nrm(next(keys), (C, d), 0.01),
            "dw1": nrm(next(keys), (d, d), (2.0 * d) ** -0.5),
            "dw2": nrm(next(keys), (d, d), (2.0 * d) ** -0.5),
            "dense_b": nrm(next(keys), (1, d), 0.05),
            "ln1_g": 1.0 + nrm(next(keys), (1, d), 0.05),
            "ln1_b": nrm(next(keys), (1, d), 0.05),
            "ln2_g": 1.0 + nrm(next(keys), (1, d), 0.05),
            "ln2_b": nrm(next(keys), (1, d), 0.05),
        }
        cycle_params.append(cp)
    down = {
        "l1_w": nrm(next(keys), (1, d), d ** -0.5),
        "l1_b": nrm(next(keys), (1, 1), 0.05),
        "l2_w": nrm(next(keys), (d, d), d ** -0.5),
        "l2_b": nrm(next(keys), (1, d), 0.05),
        "lnd_g": 1.0 + nrm(next(keys), (1, d), 0.05),
        "lnd_b": nrm(next(keys), (1, d), 0.05),
        "lf_w": nrm(next(keys), (1, d), d ** -0.5),
        "lf_b": nrm(next(keys), (1, 1), 0.05),
    }
    return init_rec, cycle_params, down


if __name__ == "__main__":
    # small shapes: batch=4, n_num_features=C=4 (n_bin=0, no categoricals),
    # P=8 prompts, d=32 hidden, n_cycles=3
    B, C, P, d, n_cycles = 4, 4, 8, 32, 3
    key = jax.random.PRNGKey(0)
    kx, kp = jax.random.split(key)
    x_num = jax.random.normal(kx, (B, C), dtype=jnp.float32)
    init_rec, cycle_params, down = _make_params(kp, C, P, d, n_cycles)

    out = trompt_forward(x_num, init_rec, cycle_params, down)
    out = jax.block_until_ready(out)
    assert out.shape == (B, n_cycles)

    # pure-JAX reference of the same torch Model.forward math
    O = jnp.broadcast_to(init_rec[None], (B, P, d))
    ref_ys = []
    for cp in cycle_params:
        O, yy = _trompt_cycle_compute(x_num, O, {**cp, **down})
        ref_ys.append(yy[:, 0])
    ref = jnp.stack(ref_ys, axis=1)
    np.testing.assert_allclose(np.asarray(out), np.asarray(ref),
                               rtol=5e-4, atol=5e-4)

    print("KERNEL_OK")
</pallas_src>

<mosaic_0001>
module attributes {stable_mosaic.version = 11 : i64} {
  func.func @_trompt_fused_kernel(%arg0: i32, %arg1: i32, %arg2: memref<1x88x128xf32, #tpu.memory_space<vmem>>, %arg3: memref<8x8xf32, #tpu.memory_space<vmem>>, %arg4: memref<8x32xf32, #tpu.memory_space<vmem>>, %arg5: memref<128x128xf32, #tpu.memory_space<vmem>>, %arg6: memref<128x32xf32, #tpu.memory_space<vmem>>, %arg7: memref<40x32xf32, #tpu.memory_space<vmem>>, %arg8: memref<8x3xf32, #tpu.memory_space<vmem>>, %arg9: memref<8x8x32xf32, #tpu.memory_space<vmem>>) attributes {dimension_semantics = [#tpu.dimension_semantics<parallel>, #tpu.dimension_semantics<arbitrary>], iteration_bounds = array<i64: 1, 3>, scalar_prefetch = 0 : i64, scratch_operands = 1 : i64, tpu.core_type = #tpu.core_type<tc>, window_params = [{transform_indices = @transform_0, window_bounds = array<i64: 1, 88, 128>}, {transform_indices = @transform_1, window_bounds = array<i64: 8, 8>}, {pipeline_mode = #tpu.pipeline_mode<synchronous>, transform_indices = @transform_2, window_bounds = array<i64: 8, 32>}, {pipeline_mode = #tpu.pipeline_mode<synchronous>, transform_indices = @transform_3, window_bounds = array<i64: 128, 128>}, {pipeline_mode = #tpu.pipeline_mode<synchronous>, transform_indices = @transform_4, window_bounds = array<i64: 128, 32>}, {pipeline_mode = #tpu.pipeline_mode<synchronous>, transform_indices = @transform_5, window_bounds = array<i64: 40, 32>}, {transform_indices = @transform_6, window_bounds = array<i64: 8, 3>}]} {
    %c0_i32 = arith.constant 0 : i32
    %0 = arith.cmpi eq, %arg1, %c0_i32 : i32
    %1 = arith.extui %0 : i1 to i32
    %c0_i32_0 = arith.constant 0 : i32
    %2 = arith.cmpi ne, %1, %c0_i32_0 : i32
    scf.if %2 {
      %c0_83 = arith.constant 0 : index
      %c0_84 = arith.constant 0 : index
      %217 = vector.load %arg4[%c0_83, %c0_84] : memref<8x32xf32, #tpu.memory_space<vmem>>, vector<8x32xf32>
      %218 = vector.shape_cast %217 : vector<8x32xf32> to vector<1x8x32xf32>
      %219 = vector.shape_cast %218 : vector<1x8x32xf32> to vector<1x8x32xf32>
      %220 = vector.broadcast %219 : vector<1x8x32xf32> to vector<8x8x32xf32>
      %c0_85 = arith.constant 0 : index
      %c0_86 = arith.constant 0 : index
      %c0_87 = arith.constant 0 : index
      %221 = vector.load %arg9[%c0_85, %c0_86, %c0_87] : memref<8x8x32xf32, #tpu.memory_space<vmem>>, vector<8x8x32xf32>
      tpu.vector_store %arg9[%c0_85, %c0_86, %c0_87], %220 {strides = array<i32>} : memref<8x8x32xf32, #tpu.memory_space<vmem>>, vector<8x8x32xf32>,
      %cst_88 = arith.constant 0.000000e+00 : f32
      %222 = vector.broadcast %cst_88 : f32 to vector<8x3xf32>
      %c0_89 = arith.constant 0 : index
      %c0_90 = arith.constant 0 : index
      %223 = vector.load %arg8[%c0_89, %c0_90] : memref<8x3xf32, #tpu.memory_space<vmem>>, vector<8x3xf32>
      tpu.vector_store %arg8[%c0_89, %c0_90], %222 {strides = array<i32>} : memref<8x3xf32, #tpu.memory_space<vmem>>, vector<8x3xf32>,
    } else {
    }
    %c0 = arith.constant 0 : index
    %c0_1 = arith.constant 0 : index
    %c0_2 = arith.constant 0 : index
    %3 = vector.load %arg2[%c0, %c0_1, %c0_2] : memref<1x88x128xf32, #tpu.memory_space<vmem>>, vector<1x8x128xf32>
    %4 = vector.shape_cast %3 : vector<1x8x128xf32> to vector<8x128xf32>
    %c0_3 = arith.constant 0 : index
    %c8 = arith.constant 8 : index
    %c0_4 = arith.constant 0 : index
    %5 = vector.load %arg2[%c0_3, %c8, %c0_4] : memref<1x88x128xf32, #tpu.memory_space<vmem>>, vector<1x8x128xf32>
    %6 = vector.shape_cast %5 : vector<1x8x128xf32> to vector<8x128xf32>
    %c0_5 = arith.constant 0 : index
    %c16 = arith.constant 16 : index
    %c0_6 = arith.constant 0 : index
    %7 = vector.load %arg2[%c0_5, %c16, %c0_6] : memref<1x88x128xf32, #tpu.memory_space<vmem>>, vector<1x8x128xf32>
    %8 = vector.shape_cast %7 : vector<1x8x128xf32> to vector<8x128xf32>
    %c0_7 = arith.constant 0 : index
    %c24 = arith.constant 24 : index
    %c0_8 = arith.constant 0 : index
    %9 = vector.load %arg2[%c0_7, %c24, %c0_8] : memref<1x88x128xf32, #tpu.memory_space<vmem>>, vector<1x8x128xf32>
    %10 = vector.shape_cast %9 : vector<1x8x128xf32> to vector<8x128xf32>
    %c0_9 = arith.constant 0 : index
    %c32 = arith.constant 32 : index
    %c0_10 = arith.constant 0 : index
    %11 = vector.load %arg2[%c0_9, %c32, %c0_10] : memref<1x88x128xf32, #tpu.memory_space<vmem>>, vector<1x8x128xf32>
    %12 = vector.shape_cast %11 : vector<1x8x128xf32> to vector<8x128xf32>
    %c0_11 = arith.constant 0 : index
    %c40 = arith.constant 40 : index
    %c0_12 = arith.constant 0 : index
    %13 = vector.load %arg2[%c0_11, %c40, %c0_12] : memref<1x88x128xf32, #tpu.memory_space<vmem>>, vector<1x32x128xf32>
    %14 = vector.shape_cast %13 : vector<1x32x128xf32> to vector<32x128xf32>
    %c0_13 = arith.constant 0 : index
    %c72 = arith.constant 72 : index
    %c0_14 = arith.constant 0 : index
    %15 = vector.load %arg2[%c0_13, %c72, %c0_14] : memref<1x88x128xf32, #tpu.memory_space<vmem>>, vector<1x8x128xf32>
    %16 = vector.shape_cast %15 : vector<1x8x128xf32> to vector<8x128xf32>
    %c0_15 = arith.constant 0 : index
    %c80 = arith.constant 80 : index
    %c0_16 = arith.constant 0 : index
    %17 = vector.load %arg2[%c0_15, %c80, %c0_16] : memref<1x88x128xf32, #tpu.memory_space<vmem>>, vector<1x1x128xf32>
    %18 = vector.shape_cast %17 : vector<1x1x128xf32> to vector<1x128xf32>
    %c0_17 = arith.constant 0 : index
    %c81 = arith.constant 81 : index
    %c0_18 = arith.constant 0 : index
    %19 = vector.load %arg2[%c0_17, %c81, %c0_18] : memref<1x88x128xf32, #tpu.memory_space<vmem>>, vector<1x1x128xf32>
    %20 = vector.shape_cast %19 : vector<1x1x128xf32> to vector<1x128xf32>
    %c0_19 = arith.constant 0 : index
    %c82 = arith.constant 82 : index
    %c0_20 = arith.constant 0 : index
    %21 = vector.load %arg2[%c0_19, %c82, %c0_20] : memref<1x88x128xf32, #tpu.memory_space<vmem>>, vector<1x1x128xf32>
    %22 = vector.shape_cast %21 : vector<1x1x128xf32> to vector<1x128xf32>
    %c0_21 = arith.constant 0 : index
    %c0_22 = arith.constant 0 : index
    %23 = vector.load %arg3[%c0_21, %c0_22] : memref<8x8xf32, #tpu.memory_space<vmem>>, vector<8x8xf32>
    %cst = arith.constant dense<0.000000e+00> : vector<8x128xf32>
    %24 = tpu.matmul %23, %16, %cst {dimension_numbers = #tpu.dot_dimension_numbers<[1], [0], [0], [1], [0, 0, 1, 1], [], []>} : vector<8x8xf32>, vector<8x128xf32>, vector<8x128xf32> -> vector<8x128xf32>
    %25 = vector.broadcast %18 : vector<1x128xf32> to vector<8x128xf32>
    %26 = arith.addf %24, %25 : vector<8x128xf32>
    %cst_23 = arith.constant 0.000000e+00 : f32
    %27 = vector.broadcast %cst_23 : f32 to vector<8x128xf32>
    %28 = arith.maximumf %26, %27 : vector<8x128xf32>
    %c0_24 = arith.constant 0 : index
    %c0_25 = arith.constant 0 : index
    %29 = vector.load %arg5[%c0_24, %c0_25] : memref<128x128xf32, #tpu.memory_space<vmem>>, vector<128x128xf32>
    %cst_26 = arith.constant dense<0.000000e+00> : vector<8x128xf32>
    %30 = tpu.matmul %28, %29, %cst_26 {dimension_numbers = #tpu.dot_dimension_numbers<[1], [0], [0], [1], [0, 0, 1, 1], [], []>} : vector<8x128xf32>, vector<128x128xf32>, vector<8x128xf32> -> vector<8x128xf32>
    %cst_27 = arith.constant 3.125000e-02 : f32
    %31 = vector.broadcast %cst_27 : f32 to vector<8x128xf32>
    %32 = arith.mulf %30, %31 : vector<8x128xf32>
    %33 = arith.mulf %28, %28 : vector<8x128xf32>
    %cst_28 = arith.constant dense<0.000000e+00> : vector<8x128xf32>
    %34 = tpu.matmul %33, %29, %cst_28 {dimension_numbers = #tpu.dot_dimension_numbers<[1], [0], [0], [1], [0, 0, 1, 1], [], []>} : vector<8x128xf32>, vector<128x128xf32>, vector<8x128xf32> -> vector<8x128xf32>
    %cst_29 = arith.constant 3.125000e-02 : f32
    %35 = vector.broadcast %cst_29 : f32 to vector<8x128xf32>
    %36 = arith.mulf %34, %35 : vector<8x128xf32>
    %37 = arith.mulf %32, %32 : vector<8x128xf32>
    %38 = arith.subf %36, %37 : vector<8x128xf32>
    %39 = arith.subf %28, %32 : vector<8x128xf32>
    %cst_30 = arith.constant 9.99999974E-6 : f32
    %40 = vector.broadcast %cst_30 : f32 to vector<8x128xf32>
    %41 = arith.addf %38, %40 : vector<8x128xf32>
    %42 = math.rsqrt %41 : vector<8x128xf32>
    %43 = arith.mulf %39, %42 : vector<8x128xf32>
    %44 = vector.broadcast %20 : vector<1x128xf32> to vector<8x128xf32>
    %45 = arith.mulf %43, %44 : vector<8x128xf32>
    %46 = vector.broadcast %22 : vector<1x128xf32> to vector<8x128xf32>
    %47 = arith.addf %45, %46 : vector<8x128xf32>
    %48 = vector.shape_cast %47 : vector<8x128xf32> to vector<8x1x128xf32>
    %49 = vector.shape_cast %4 : vector<8x128xf32> to vector<1x8x128xf32>
    %50 = vector.broadcast %48 : vector<8x1x128xf32> to vector<8x8x128xf32>
    %51 = vector.broadcast %49 : vector<1x8x128xf32> to vector<8x8x128xf32>
    %52 = arith.mulf %50, %51 : vector<8x8x128xf32>
    %53 = vector.shape_cast %6 : vector<8x128xf32> to vector<1x8x128xf32>
    %54 = vector.broadcast %53 : vector<1x8x128xf32> to vector<8x8x128xf32>
    %55 = arith.addf %52, %54 : vector<8x8x128xf32>
    %cst_31 = arith.constant 0.000000e+00 : f32
    %56 = vector.broadcast %cst_31 : f32 to vector<8x8x128xf32>
    %57 = arith.maximumf %55, %56 : vector<8x8x128xf32>
    %cst_32 = arith.constant dense<0.000000e+00> : vector<8x8xf32>
    %58 = vector.multi_reduction <add>, %57, %cst_32 [2] : vector<8x8x128xf32> to vector<8x8xf32>
    %59 = vector.shape_cast %58 : vector<8x8xf32> to vector<8x8x1xf32>
    %60 = arith.mulf %57, %57 : vector<8x8x128xf32>
    %cst_33 = arith.constant dense<0.000000e+00> : vector<8x8xf32>
    %61 = vector.multi_reduction <add>, %60, %cst_33 [2] : vector<8x8x128xf32> to vector<8x8xf32>
    %62 = vector.shape_cast %61 : vector<8x8xf32> to vector<8x8x1xf32>
    %63 = vector.extract_strided_slice %59 {offsets = [0, 0, 0], sizes = [8, 4, 1], strides = [1, 1, 1]} : vector<8x8x1xf32> to vector<8x4x1xf32>
    %cst_34 = arith.constant dense<0.000000e+00> : vector<8x1xf32>
    %64 = vector.multi_reduction <add>, %63, %cst_34 [1] : vector<8x4x1xf32> to vector<8x1xf32>
    %65 = vector.shape_cast %64 : vector<8x1xf32> to vector<8x1x1xf32>
    %cst_35 = arith.constant 0.001953125 : f32
    %66 = vector.broadcast %cst_35 : f32 to vector<8x1x1xf32>
    %67 = arith.mulf %65, %66 : vector<8x1x1xf32>
    %68 = vector.extract_strided_slice %59 {offsets = [0, 4, 0], sizes = [8, 4, 1], strides = [1, 1, 1]} : vector<8x8x1xf32> to vector<8x4x1xf32>
    %cst_36 = arith.constant dense<0.000000e+00> : vector<8x1xf32>
    %69 = vector.multi_reduction <add>, %68, %cst_36 [1] : vector<8x4x1xf32> to vector<8x1xf32>
    %70 = vector.shape_cast %69 : vector<8x1xf32> to vector<8x1x1xf32>
    %cst_37 = arith.constant 0.001953125 : f32
    %71 = vector.broadcast %cst_37 : f32 to vector<8x1x1xf32>
    %72 = arith.mulf %70, %71 : vector<8x1x1xf32>
    %73 = vector.extract_strided_slice %62 {offsets = [0, 0, 0], sizes = [8, 4, 1], strides = [1, 1, 1]} : vector<8x8x1xf32> to vector<8x4x1xf32>
    %cst_38 = arith.constant dense<0.000000e+00> : vector<8x1xf32>
    %74 = vector.multi_reduction <add>, %73, %cst_38 [1] : vector<8x4x1xf32> to vector<8x1xf32>
    %75 = vector.shape_cast %74 : vector<8x1xf32> to vector<8x1x1xf32>
    %cst_39 = arith.constant 0.001953125 : f32
    %76 = vector.broadcast %cst_39 : f32 to vector<8x1x1xf32>
    %77 = arith.mulf %75, %76 : vector<8x1x1xf32>
    %78 = vector.extract_strided_slice %62 {offsets = [0, 4, 0], sizes = [8, 4, 1], strides = [1, 1, 1]} : vector<8x8x1xf32> to vector<8x4x1xf32>
    %cst_40 = arith.constant dense<0.000000e+00> : vector<8x1xf32>
    %79 = vector.multi_reduction <add>, %78, %cst_40 [1] : vector<8x4x1xf32> to vector<8x1xf32>
    %80 = vector.shape_cast %79 : vector<8x1xf32> to vector<8x1x1xf32>
    %cst_41 = arith.constant 0.001953125 : f32
    %81 = vector.broadcast %cst_41 : f32 to vector<8x1x1xf32>
    %82 = arith.mulf %80, %81 : vector<8x1x1xf32>
    %83 = tpu.iota {dimensions = array<i32: 1>} : vector<1x8x1xi32>
    %c4_i32 = arith.constant 4 : i32
    %84 = vector.broadcast %c4_i32 : i32 to vector<1x8x1xi32>
    %85 = arith.cmpi slt, %83, %84 : vector<1x8x1xi32>
    %86 = vector.shape_cast %85 : vector<1x8x1xi1> to vector<1x8x1xi1>
    %87 = vector.broadcast %86 : vector<1x8x1xi1> to vector<8x8x1xi1>
    %88 = vector.shape_cast %67 : vector<8x1x1xf32> to vector<8x1x1xf32>
    %89 = vector.broadcast %88 : vector<8x1x1xf32> to vector<8x8x1xf32>
    %90 = vector.shape_cast %72 : vector<8x1x1xf32> to vector<8x1x1xf32>
    %91 = vector.broadcast %90 : vector<8x1x1xf32> to vector<8x8x1xf32>
    %92 = arith.select %87, %89, %91 : vector<8x8x1xi1>, vector<8x8x1xf32>
    %c4_i32_42 = arith.constant 4 : i32
    %93 = vector.broadcast %c4_i32_42 : i32 to vector<1x8x1xi32>
    %94 = arith.cmpi slt, %83, %93 : vector<1x8x1xi32>
    %95 = arith.mulf %67, %67 : vector<8x1x1xf32>
    %96 = arith.subf %77, %95 : vector<8x1x1xf32>
    %97 = arith.mulf %72, %72 : vector<8x1x1xf32>
    %98 = arith.subf %82, %97 : vector<8x1x1xf32>
    %99 = vector.shape_cast %94 : vector<1x8x1xi1> to vector<1x8x1xi1>
    %100 = vector.broadcast %99 : vector<1x8x1xi1> to vector<8x8x1xi1>
    %101 = vector.shape_cast %96 : vector<8x1x1xf32> to vector<8x1x1xf32>
    %102 = vector.broadcast %101 : vector<8x1x1xf32> to vector<8x8x1xf32>
    %103 = vector.shape_cast %98 : vector<8x1x1xf32> to vector<8x1x1xf32>
    %104 = vector.broadcast %103 : vector<8x1x1xf32> to vector<8x8x1xf32>
    %105 = arith.select %100, %102, %104 : vector<8x8x1xi1>, vector<8x8x1xf32>
    %106 = vector.broadcast %92 : vector<8x8x1xf32> to vector<8x8x128xf32>
    %107 = arith.subf %57, %106 : vector<8x8x128xf32>
    %cst_43 = arith.constant 9.99999974E-6 : f32
    %108 = vector.broadcast %cst_43 : f32 to vector<8x8x1xf32>
    %109 = arith.addf %105, %108 : vector<8x8x1xf32>
    %110 = math.rsqrt %109 : vector<8x8x1xf32>
    %111 = vector.broadcast %110 : vector<8x8x1xf32> to vector<8x8x128xf32>
    %112 = arith.mulf %107, %111 : vector<8x8x128xf32>
    %113 = vector.shape_cast %8 : vector<8x128xf32> to vector<1x8x128xf32>
    %114 = vector.broadcast %113 : vector<1x8x128xf32> to vector<8x8x128xf32>
    %115 = arith.mulf %112, %114 : vector<8x8x128xf32>
    %116 = vector.shape_cast %10 : vector<8x128xf32> to vector<1x8x128xf32>
    %117 = vector.broadcast %116 : vector<1x8x128xf32> to vector<8x8x128xf32>
    %118 = arith.addf %115, %117 : vector<8x8x128xf32>
    %119 = vector.shape_cast %47 : vector<8x128xf32> to vector<8x1x128xf32>
    %120 = vector.broadcast %119 : vector<8x1x128xf32> to vector<8x8x128xf32>
    %121 = arith.addf %120, %118 : vector<8x8x128xf32>
    %c0_44 = arith.constant 0 : index
    %c0_45 = arith.constant 0 : index
    %c0_46 = arith.constant 0 : index
    %122 = vector.load %arg9[%c0_44, %c0_45, %c0_46] : memref<8x8x32xf32, #tpu.memory_space<vmem>>, vector<8x8x32xf32>
    %123 = vector.shape_cast %122 : vector<8x8x32xf32> to vector<64x32xf32>
    %cst_47 = arith.constant dense<0.000000e+00> : vector<64x128xf32>
    %124 = tpu.matmul %123, %14, %cst_47 {dimension_numbers = #tpu.dot_dimension_numbers<[1], [0], [0], [1], [0, 0, 1, 1], [], []>} : vector<64x32xf32>, vector<32x128xf32>, vector<64x128xf32> -> vector<64x128xf32>
    %125 = vector.shape_cast %124 : vector<64x128xf32> to vector<8x8x128xf32>
    %126 = vector.shape_cast %12 : vector<8x128xf32> to vector<1x8x128xf32>
    %127 = vector.broadcast %126 : vector<1x8x128xf32> to vector<8x8x128xf32>
    %128 = arith.addf %125, %127 : vector<8x8x128xf32>
    %cst_48 = arith.constant dense<0xFF800000> : vector<8x8xf32>
    %129 = vector.multi_reduction <maximumf>, %128, %cst_48 [2] : vector<8x8x128xf32> to vector<8x8xf32>
    %130 = vector.shape_cast %129 : vector<8x8xf32> to vector<8x8x1xf32>
    %131 = vector.broadcast %130 : vector<8x8x1xf32> to vector<8x8x128xf32>
    %132 = arith.subf %128, %131 : vector<8x8x128xf32>
    %133 = math.exp %132 : vector<8x8x128xf32>
    %cst_49 = arith.constant dense<0.000000e+00> : vector<8x8xf32>
    %134 = vector.multi_reduction <add>, %133, %cst_49 [2] : vector<8x8x128xf32> to vector<8x8xf32>
    %135 = vector.shape_cast %134 : vector<8x8xf32> to vector<8x8x1xf32>
    %136 = tpu.reciprocal %135 : vector<8x8x1xf32> -> vector<8x8x1xf32>
    %cst_50 = arith.constant 3.200000e+01 : f32
    %137 = vector.broadcast %cst_50 : f32 to vector<8x8x1xf32>
    %138 = arith.mulf %137, %136 : vector<8x8x1xf32>
    %139 = vector.broadcast %138 : vector<8x8x1xf32> to vector<8x8x128xf32>
    %140 = arith.mulf %133, %139 : vector<8x8x128xf32>
    %141 = arith.mulf %140, %121 : vector<8x8x128xf32>
    %142 = vector.shape_cast %141 : vector<8x8x128xf32> to vector<64x128xf32>
    %c0_51 = arith.constant 0 : index
    %c0_52 = arith.constant 0 : index
    %143 = vector.load %arg6[%c0_51, %c0_52] : memref<128x32xf32, #tpu.memory_space<vmem>>, vector<128x32xf32>
    %cst_53 = arith.constant dense<0.000000e+00> : vector<64x32xf32>
    %144 = tpu.matmul %142, %143, %cst_53 {dimension_numbers = #tpu.dot_dimension_numbers<[1], [0], [0], [1], [0, 0, 1, 1], [], []>} : vector<64x128xf32>, vector<128x32xf32>, vector<64x32xf32> -> vector<64x32xf32>
    %145 = vector.shape_cast %144 : vector<64x32xf32> to vector<8x8x32xf32>
    %c0_54 = arith.constant 0 : index
    %c0_55 = arith.constant 0 : index
    %c0_56 = arith.constant 0 : index
    %146 = vector.load %arg9[%c0_54, %c0_55, %c0_56] : memref<8x8x32xf32, #tpu.memory_space<vmem>>, vector<8x8x32xf32>
    tpu.vector_store %arg9[%c0_54, %c0_55, %c0_56], %145 {strides = array<i32>} : memref<8x8x32xf32, #tpu.memory_space<vmem>>, vector<8x8x32xf32>,
    %c0_57 = arith.constant 0 : index
    %c0_58 = arith.constant 0 : index
    %147 = vector.load %arg7[%c0_57, %c0_58] : memref<40x32xf32, #tpu.memory_space<vmem>>, vector<32x32xf32>
    %c32_59 = arith.constant 32 : index
    %c0_60 = arith.constant 0 : index
    %148 = vector.load %arg7[%c32_59, %c0_60] : memref<40x32xf32, #tpu.memory_space<vmem>>, vector<1x32xf32>
    %c33 = arith.constant 33 : index
    %c0_61 = arith.constant 0 : index
    %149 = vector.load %arg7[%c33, %c0_61] : memref<40x32xf32, #tpu.memory_space<vmem>>, vector<1x32xf32>
    %c34 = arith.constant 34 : index
    %c0_62 = arith.constant 0 : index
    %150 = vector.load %arg7[%c34, %c0_62] : memref<40x32xf32, #tpu.memory_space<vmem>>, vector<1x32xf32>
    %c35 = arith.constant 35 : index
    %c0_63 = arith.constant 0 : index
    %151 = vector.load %arg7[%c35, %c0_63] : memref<40x32xf32, #tpu.memory_space<vmem>>, vector<1x32xf32>
    %c36 = arith.constant 36 : index
    %c0_64 = arith.constant 0 : index
    %152 = vector.load %arg7[%c36, %c0_64] : memref<40x32xf32, #tpu.memory_space<vmem>>, vector<1x32xf32>
    %c37 = arith.constant 37 : index
    %c0_65 = arith.constant 0 : index
    %153 = vector.load %arg7[%c37, %c0_65] : memref<40x32xf32, #tpu.memory_space<vmem>>, vector<1x1xf32>
    %c38 = arith.constant 38 : index
    %c0_66 = arith.constant 0 : index
    %154 = vector.load %arg7[%c38, %c0_66] : memref<40x32xf32, #tpu.memory_space<vmem>>, vector<1x1xf32>
    %155 = vector.shape_cast %148 : vector<1x32xf32> to vector<1x1x32xf32>
    %156 = vector.broadcast %155 : vector<1x1x32xf32> to vector<8x8x32xf32>
    %157 = arith.mulf %145, %156 : vector<8x8x32xf32>
    %cst_67 = arith.constant dense<0.000000e+00> : vector<8x8xf32>
    %158 = vector.multi_reduction <add>, %157, %cst_67 [2] : vector<8x8x32xf32> to vector<8x8xf32>
    %159 = vector.shape_cast %158 : vector<8x8xf32> to vector<8x8x1xf32>
    %160 = vector.shape_cast %153 : vector<1x1xf32> to vector<1x1x1xf32>
    %161 = vector.broadcast %160 : vector<1x1x1xf32> to vector<8x8x1xf32>
    %162 = arith.addf %159, %161 : vector<8x8x1xf32>
    %cst_68 = arith.constant dense<0xFF800000> : vector<8x1xf32>
    %163 = vector.multi_reduction <maximumf>, %162, %cst_68 [1] : vector<8x8x1xf32> to vector<8x1xf32>
    %164 = vector.shape_cast %163 : vector<8x1xf32> to vector<8x1x1xf32>
    %165 = vector.broadcast %164 : vector<8x1x1xf32> to vector<8x8x1xf32>
    %166 = arith.subf %162, %165 : vector<8x8x1xf32>
    %167 = math.exp %166 : vector<8x8x1xf32>
    %cst_69 = arith.constant dense<0.000000e+00> : vector<8x1xf32>
    %168 = vector.multi_reduction <add>, %167, %cst_69 [1] : vector<8x8x1xf32> to vector<8x1xf32>
    %169 = vector.shape_cast %168 : vector<8x1xf32> to vector<8x1x1xf32>
    %170 = tpu.reciprocal %169 : vector<8x1x1xf32> -> vector<8x1x1xf32>
    %171 = vector.broadcast %170 : vector<8x1x1xf32> to vector<8x8x1xf32>
    %172 = arith.mulf %167, %171 : vector<8x8x1xf32>
    %173 = vector.broadcast %172 : vector<8x8x1xf32> to vector<8x8x32xf32>
    %174 = arith.mulf %173, %145 : vector<8x8x32xf32>
    %cst_70 = arith.constant dense<0.000000e+00> : vector<8x32xf32>
    %175 = vector.multi_reduction <add>, %174, %cst_70 [1] : vector<8x8x32xf32> to vector<8x32xf32>
    %cst_71 = arith.constant dense<0.000000e+00> : vector<8x32xf32>
    %176 = tpu.matmul %175, %147, %cst_71 {dimension_numbers = #tpu.dot_dimension_numbers<[1], [0], [0], [1], [0, 0, 1, 1], [], []>} : vector<8x32xf32>, vector<32x32xf32>, vector<8x32xf32> -> vector<8x32xf32>
    %177 = vector.broadcast %149 : vector<1x32xf32> to vector<8x32xf32>
    %178 = arith.addf %176, %177 : vector<8x32xf32>
    %cst_72 = arith.constant 0.000000e+00 : f32
    %179 = vector.broadcast %cst_72 : f32 to vector<8x32xf32>
    %180 = arith.maximumf %178, %179 : vector<8x32xf32>
    %cst_73 = arith.constant dense<0.000000e+00> : vector<8xf32>
    %181 = vector.multi_reduction <add>, %180, %cst_73 [1] : vector<8x32xf32> to vector<8xf32>
    %182 = vector.shape_cast %181 : vector<8xf32> to vector<8x1xf32>
    %cst_74 = arith.constant 3.200000e+01 : f32
    %183 = vector.broadcast %cst_74 : f32 to vector<8x1xf32>
    %184 = arith.divf %182, %183 : vector<8x1xf32>
    %185 = vector.broadcast %184 : vector<8x1xf32> to vector<8x32xf32>
    %186 = arith.subf %180, %185 : vector<8x32xf32>
    %187 = arith.mulf %186, %186 : vector<8x32xf32>
    %cst_75 = arith.constant dense<0.000000e+00> : vector<8xf32>
    %188 = vector.multi_reduction <add>, %187, %cst_75 [1] : vector<8x32xf32> to vector<8xf32>
    %189 = vector.shape_cast %188 : vector<8xf32> to vector<8x1xf32>
    %cst_76 = arith.constant 3.200000e+01 : f32
    %190 = vector.broadcast %cst_76 : f32 to vector<8x1xf32>
    %191 = arith.divf %189, %190 : vector<8x1xf32>
    %192 = vector.broadcast %184 : vector<8x1xf32> to vector<8x32xf32>
    %193 = arith.subf %180, %192 : vector<8x32xf32>
    %cst_77 = arith.constant 9.99999974E-6 : f32
    %194 = vector.broadcast %cst_77 : f32 to vector<8x1xf32>
    %195 = arith.addf %191, %194 : vector<8x1xf32>
    %196 = math.rsqrt %195 : vector<8x1xf32>
    %197 = vector.broadcast %196 : vector<8x1xf32> to vector<8x32xf32>
    %198 = arith.mulf %193, %197 : vector<8x32xf32>
    %199 = vector.broadcast %150 : vector<1x32xf32> to vector<8x32xf32>
    %200 = arith.mulf %198, %199 : vector<8x32xf32>
    %201 = vector.broadcast %151 : vector<1x32xf32> to vector<8x32xf32>
    %202 = arith.addf %200, %201 : vector<8x32xf32>
    %203 = vector.broadcast %152 : vector<1x32xf32> to vector<8x32xf32>
    %204 = arith.mulf %202, %203 : vector<8x32xf32>
    %cst_78 = arith.constant dense<0.000000e+00> : vector<8xf32>
    %205 = vector.multi_reduction <add>, %204, %cst_78 [1] : vector<8x32xf32> to vector<8xf32>
    %206 = vector.shape_cast %205 : vector<8xf32> to vector<8x1xf32>
    %207 = vector.broadcast %154 : vector<1x1xf32> to vector<8x1xf32>
    %208 = arith.addf %206, %207 : vector<8x1xf32>
    %209 = tpu.iota {dimensions = array<i32: 1>} : vector<8x3xi32>
    %210 = vector.broadcast %arg1 : i32 to vector<8x3xi32>
    %211 = arith.cmpi eq, %209, %210 : vector<8x3xi32>
    %c0_79 = arith.constant 0 : index
    %c0_80 = arith.constant 0 : index
    %212 = vector.load %arg8[%c0_79, %c0_80] : memref<8x3xf32, #tpu.memory_space<vmem>>, vector<8x3xf32>
    %213 = vector.shape_cast %208 : vector<8x1xf32> to vector<8x1xf32>
    %214 = vector.broadcast %213 : vector<8x1xf32> to vector<8x3xf32>
    %215 = arith.select %211, %214, %212 : vector<8x3xi1>, vector<8x3xf32>
    %c0_81 = arith.constant 0 : index
    %c0_82 = arith.constant 0 : index
    %216 = vector.load %arg8[%c0_81, %c0_82] : memref<8x3xf32, #tpu.memory_space<vmem>>, vector<8x3xf32>
    tpu.vector_store %arg8[%c0_81, %c0_82], %215 {strides = array<i32>} : memref<8x3xf32, #tpu.memory_space<vmem>>, vector<8x3xf32>,
    return
  }
  func.func @transform_0(%arg0: i32, %arg1: i32) -> (i32, i32, i32) {
    %c0_i32 = arith.constant 0 : i32
    %c0_i32_0 = arith.constant 0 : i32
    %c0_i32_1 = arith.constant 0 : i32
    return %arg1, %c0_i32, %c0_i32_0 : i32, i32, i32
  }
  func.func @transform_1(%arg0: i32, %arg1: i32) -> (i32, i32) {
    %c0_i32 = arith.constant 0 : i32
    %c0_i32_0 = arith.constant 0 : i32
    return %arg0, %c0_i32 : i32, i32
  }
  func.func @transform_2(%arg0: i32, %arg1: i32) -> (i32, i32) {
    %c0_i32 = arith.constant 0 : i32
    %c0_i32_0 = arith.constant 0 : i32
    %c0_i32_1 = arith.constant 0 : i32
    return %c0_i32, %c0_i32_0 : i32, i32
  }
  func.func @transform_3(%arg0: i32, %arg1: i32) -> (i32, i32) {
    %c0_i32 = arith.constant 0 : i32
    %c0_i32_0 = arith.constant 0 : i32
    %c0_i32_1 = arith.constant 0 : i32
    return %c0_i32, %c0_i32_0 : i32, i32
  }
  func.func @transform_4(%arg0: i32, %arg1: i32) -> (i32, i32) {
    %c0_i32 = arith.constant 0 : i32
    %c0_i32_0 = arith.constant 0 : i32
    %c0_i32_1 = arith.constant 0 : i32
    return %c0_i32, %c0_i32_0 : i32, i32
  }
  func.func @transform_5(%arg0: i32, %arg1: i32) -> (i32, i32) {
    %c0_i32 = arith.constant 0 : i32
    %c0_i32_0 = arith.constant 0 : i32
    %c0_i32_1 = arith.constant 0 : i32
    return %c0_i32, %c0_i32_0 : i32, i32
  }
  func.func @transform_6(%arg0: i32, %arg1: i32) -> (i32, i32) {
    %c0_i32 = arith.constant 0 : i32
    %c0_i32_0 = arith.constant 0 : i32
    return %arg0, %c0_i32 : i32, i32
  }
}

</mosaic_0001>

<llo_original>
// kernel: mul.117
$region0: #{mul.117}
  %s0 = inlined_call_operand.vmem [shape: f32[4,32], index: 0, kind: input, shape index: {}]
  %s1 = inlined_call_operand.vmem [shape: f32[128], index: 1, kind: output, shape index: {}]
  $region1: #{mul.117} parent=0
    #allocation0 [shape = 'u8[4096]{0}', space=vmem, size = 0x1000, scoped, tag = 'scoped mem for output reshape']
    #allocation1 [shape = 'u8[4096]{0}', space=vmem, size = 0x1000, scoped, tag = 'scoped mem for input reshape']
    %s3 = sshllo.u32 0, 4
    %v4 = vld [vmem:[%s0] sm:%s3]
    %5 = vst [vmem:[#allocation1] sm:%s3] %v4
    %v6 = vld [vmem:[#allocation1] sm:$0x1]
    %vm7 = vcmask 261120
    %8 = vst.msk [vmem:[#allocation0] sm:$0x1] %vm7, %v6
    %s9 = scalar_lea.vmem [#allocation1], 3
    %v10 = vld [vmem:[%s9] sm:$0x1]
    %11 = vrot.lane.b32.xlu0 %v10, 96
    %v12 = vpop.permute.xlu0 %11
    %vm13 = vcmask 1048320
    %14 = vst.msk [vmem:[#allocation0] sm:$0x1] %vm13, %v12
    %s15 = scalar_lea.vmem [#allocation1], 2
    %v16 = vld [vmem:[%s15] sm:$0x1]
    %17 = vrot.lane.b32.xlu0 %v16, 64
    %v18 = vpop.permute.xlu0 %17
    %vm19 = vcmask 785920
    %20 = vst.msk [vmem:[#allocation0] sm:$0x1] %vm19, %v18
    %s21 = scalar_lea.vmem [#allocation1], 1
    %v22 = vld [vmem:[%s21] sm:$0x1]
    %23 = vrot.lane.b32.xlu0 %v22, 32
    %v24 = vpop.permute.xlu0 %23
    %vm25 = vcmask 523520
    %26 = vst.msk [vmem:[#allocation0] sm:$0x1] %vm25, %v24
    %s28 = sshllo.u32 0, 1
    %v30 = vld [vmem:[#allocation0] sm:%s28]
    %s31 = sshllo.u32 0, 1
    %32 = vst [vmem:[%s1] sm:%s31] %v30

// kernel: trompt_forward.1
$region0: #{trompt_forward.1}
  #allocation0 [shape = 'u32[]', space=smem, size = 0x4, offset = 0x4, fixed_abs, tag = 'smem constant byte address 0x4 - core index']
  #allocation1 [shape = 'u32[144,128]{1,0:T(1,128)}', space=vmem, size = 0x12000, scoped, tag = 'internal scratch']
  #allocation2 [shape = 'f32[8,8,32]{2,1,0:T(8,128)}', space=vmem, size = 0x8000, scoped, tag = 'scratch operand']
  %s0 = inlined_call_operand.vmem [shape: f32[3,88,128], index: 0, kind: input, shape index: {}]
  %s1 = inlined_call_operand.vmem [shape: f32[8,8], index: 1, kind: input, shape index: {}]
  %s2 = inlined_call_operand.vmem [shape: f32[8,32], index: 2, kind: input, shape index: {}]
  %s3 = inlined_call_operand.vmem [shape: f32[128,128], index: 3, kind: input, shape index: {}]
  %s4 = inlined_call_operand.vmem [shape: f32[128,32], index: 4, kind: input, shape index: {}]
  %s5 = inlined_call_operand.vmem [shape: f32[40,32], index: 5, kind: input, shape index: {}]
  %s6 = inlined_call_operand.vmem [shape: f32[8,3], index: 6, kind: output, shape index: {}]
  %s7 = sld [smem:[#allocation0]]
  $region61: #{trompt_forward.1} parent=0
    _
  %s9 = ssub.s32 1, %s7
  %s10 = scalar_select 0, %s9, %s7
  loop: start=0, step=1, limit=5
  $region2: #{trompt_forward.1} parent=0 // loop_pre_header
    _
  $region3: #{trompt_forward.1} parent=0 // loop_header
    %s12 = sphi 0, %s16
    %p13 = scmp.ge.s32.totalorder %s12, 5
    %s19 = sphi 0, %s31
    %s20 = sphi 0, %s27
    %s21 = sphi 0, %s19
    %s22 = sphi 0, %s20
    %s23 = sphi 0, %s21
    %s24 = sphi 0, %s22
    %s34 = sphi 0, %s36
    %s37 = sphi 0, %s34
    %s38 = sphi 0, %s37
    %s54 = sphi 0, %s38
    %s60 = sphi 0, %s62
    %s63 = sphi 0, %s60
    %s64 = sphi 0, %s63
    %s80 = sphi 0, %s64
    %s84 = sphi 0, %s84
    %s86 = sphi 0, %s84
    %s87 = sphi 0, %s86
    %s101 = sphi 0, %s87
    %s105 = sphi 0, %s105
    %s107 = sphi 0, %s105
    %s108 = sphi 0, %s107
    %s122 = sphi 0, %s108
    %s126 = sphi 0, %s126
    %s128 = sphi 0, %s126
    %s129 = sphi 0, %s128
    %s143 = sphi 0, %s129
    %s147 = sphi 0, %s147
    %s149 = sphi 0, %s147
    %s150 = sphi 0, %s149
    %s164 = sphi 0, %s150
    %s170 = sphi 0, %s172
    %s173 = sphi 0, %s170
    %s174 = sphi 0, %s173
    %s190 = sphi 0, %s174
  $region4: #{trompt_forward.1} parent=0 // loop_header_branch
    %15 = sbr.rel (%p13) target = $region8
  $region5: #{trompt_forward.1} parent=0 // loop_body
    %s17 = ssub.s32 %s12, 1
    %s18 = ssub.s32 %s12, 2
    %s25 = sadd.s32 1, %s20
    %p26 = scmp.ge.s32.totalorder %s25, 3
    %s27 = scalar_select %p26, 0, %s25
    %s28 = sadd.s32 1, %s19
    %s29 = scalar_select %p26, %s28, %s19
    %p30 = scmp.ge.s32.totalorder %s29, 1
    %s31 = scalar_select %p30, 0, %s29
    %s32 = ssub.s32 %s20, %s27
    %p33 = scmp.eq.s32.totalorder %s32, 0
    %s35 = sadd.s32 %s34, 1
    %s36 = scalar_select %p33, %s34, %s35
    %p39 = pneg %p33
    %p40 = scmp.eq.s32.totalorder %s12, 2
    %p41 = por %p39, %p40
    %p42 = scmp.ne.s32.totalorder %s34, %s37
    %p43 = scmp.eq.s32.totalorder %s12, 0
    %p44 = por %p42, %p43
    %p45 = scmp.ne.s32.totalorder %s34, %s37
    %p46 = scmp.eq.s32.totalorder %s17, 2
    %p47 = por %p45, %p46
    %p48 = scmp.ne.s32.totalorder %s37, %s38
    %p49 = scmp.eq.s32.totalorder %s17, 0
    %p50 = por %p48, %p49
    %p51 = scmp.ne.s32.totalorder %s37, %s38
    %p52 = scmp.eq.s32.totalorder %s18, 2
    %p53 = por %p51, %p52
    %p55 = scmp.ne.s32.totalorder %s38, %s54
    %p56 = scmp.eq.s32.totalorder %s18, 0
    %p57 = por %p55, %p56
    %s58 = ssub.s32 %s19, %s31
    %p59 = scmp.eq.s32.totalorder %s58, 0
    %s61 = sadd.s32 %s60, 1
    %s62 = scalar_select %p59, %s60, %s61
    %p65 = pneg %p59
    %p66 = scmp.eq.s32.totalorder %s12, 2
    %p67 = por %p65, %p66
    %p68 = scmp.ne.s32.totalorder %s60, %s63
    %p69 = scmp.eq.s32.totalorder %s12, 0
    %p70 = por %p68, %p69
    %p71 = scmp.ne.s32.totalorder %s60, %s63
    %p72 = scmp.eq.s32.totalorder %s17, 2
    %p73 = por %p71, %p72
    %p74 = scmp.ne.s32.totalorder %s63, %s64
    %p75 = scmp.eq.s32.totalorder %s17, 0
    %p76 = por %p74, %p75
    %p77 = scmp.ne.s32.totalorder %s63, %s64
    %p78 = scmp.eq.s32.totalorder %s18, 2
    %p79 = por %p77, %p78
    %p81 = scmp.ne.s32.totalorder %s64, %s80
    %p82 = scmp.eq.s32.totalorder %s18, 0
    %p83 = por %p81, %p82
    %s85 = sadd.s32 %s84, 1
    %p88 = scmp.eq.s32.totalorder %s12, 2
    %p89 = scmp.ne.s32.totalorder %s84, %s86
    %p90 = scmp.eq.s32.totalorder %s12, 0
    %p91 = por %p89, %p90
    %p92 = scmp.ne.s32.totalorder %s84, %s86
    %p93 = scmp.eq.s32.totalorder %s17, 2
    %p94 = por %p92, %p93
    %p95 = scmp.ne.s32.totalorder %s86, %s87
    %p96 = scmp.eq.s32.totalorder %s17, 0
    %p97 = por %p95, %p96
    %p98 = scmp.ne.s32.totalorder %s86, %s87
    %p99 = scmp.eq.s32.totalorder %s18, 2
    %p100 = por %p98, %p99
    %p102 = scmp.ne.s32.totalorder %s87, %s101
    %p103 = scmp.eq.s32.totalorder %s18, 0
    %p104 = por %p102, %p103
    %s106 = sadd.s32 %s105, 1
    %p109 = scmp.eq.s32.totalorder %s12, 2
    %p110 = scmp.ne.s32.totalorder %s105, %s107
    %p111 = scmp.eq.s32.totalorder %s12, 0
    %p112 = por %p110, %p111
    %p113 = scmp.ne.s32.totalorder %s105, %s107
    %p114 = scmp.eq.s32.totalorder %s17, 2
    %p115 = por %p113, %p114
    %p116 = scmp.ne.s32.totalorder %s107, %s108
    %p117 = scmp.eq.s32.totalorder %s17, 0
    %p118 = por %p116, %p117
    %p119 = scmp.ne.s32.totalorder %s107, %s108
    %p120 = scmp.eq.s32.totalorder %s18, 2
    %p121 = por %p119, %p120
    %p123 = scmp.ne.s32.totalorder %s108, %s122
    %p124 = scmp.eq.s32.totalorder %s18, 0
    %p125 = por %p123, %p124
    %s127 = sadd.s32 %s126, 1
    %p130 = scmp.eq.s32.totalorder %s12, 2
    %p131 = scmp.ne.s32.totalorder %s126, %s128
    %p132 = scmp.eq.s32.totalorder %s12, 0
    %p133 = por %p131, %p132
    %p134 = scmp.ne.s32.totalorder %s126, %s128
    %p135 = scmp.eq.s32.totalorder %s17, 2
    %p136 = por %p134, %p135
    %p137 = scmp.ne.s32.totalorder %s128, %s129
    %p138 = scmp.eq.s32.totalorder %s17, 0
    %p139 = por %p137, %p138
    %p140 = scmp.ne.s32.totalorder %s128, %s129
    %p141 = scmp.eq.s32.totalorder %s18, 2
    %p142 = por %p140, %p141
    %p144 = scmp.ne.s32.totalorder %s129, %s143
    %p145 = scmp.eq.s32.totalorder %s18, 0
    %p146 = por %p144, %p145
    %s148 = sadd.s32 %s147, 1
    %p151 = scmp.eq.s32.totalorder %s12, 2
    %p152 = scmp.ne.s32.totalorder %s147, %s149
    %p153 = scmp.eq.s32.totalorder %s12, 0
    %p154 = por %p152, %p153
    %p155 = scmp.ne.s32.totalorder %s147, %s149
    %p156 = scmp.eq.s32.totalorder %s17, 2
    %p157 = por %p155, %p156
    %p158 = scmp.ne.s32.totalorder %s149, %s150
    %p159 = scmp.eq.s32.totalorder %s17, 0
    %p160 = por %p158, %p159
    %p161 = scmp.ne.s32.totalorder %s149, %s150
    %p162 = scmp.eq.s32.totalorder %s18, 2
    %p163 = por %p161, %p162
    %p165 = scmp.ne.s32.totalorder %s150, %s164
    %p166 = scmp.eq.s32.totalorder %s18, 0
    %p167 = por %p165, %p166
    %s168 = ssub.s32 %s19, %s31
    %p169 = scmp.eq.s32.totalorder %s168, 0
    %s171 = sadd.s32 %s170, 1
    %s172 = scalar_select %p169, %s170, %s171
    %p175 = pneg %p169
    %p176 = scmp.eq.s32.totalorder %s12, 2
    %p177 = por %p175, %p176
    %p178 = scmp.ne.s32.totalorder %s170, %s173
    %p179 = scmp.eq.s32.totalorder %s12, 0
    %p180 = por %p178, %p179
    %p181 = scmp.ne.s32.totalorder %s170, %s173
    %p182 = scmp.eq.s32.totalorder %s17, 2
    %p183 = por %p181, %p182
    %p184 = scmp.ne.s32.totalorder %s173, %s174
    %p185 = scmp.eq.s32.totalorder %s17, 0
    %p186 = por %p184, %p185
    %p187 = scmp.ne.s32.totalorder %s173, %s174
    %p188 = scmp.eq.s32.totalorder %s18, 2
    %p189 = por %p187, %p188
    %p191 = scmp.ne.s32.totalorder %s174, %s190
    %p192 = scmp.eq.s32.totalorder %s18, 0
    %p193 = por %p191, %p192
    %p194 = scmp.le.s32.totalorder 1, %s12
    %p195 = scmp.lt.s32.totalorder %s12, 4
    %p196 = pnand %p194, %p195
    %p197 = pneg %p196
    // Predicated region
    $region9: #{trompt_forward.1} parent=5 // pred_check
      _
    $region10: #{trompt_forward.1} parent=5 // pred_check_branch
      %199 = sbr.rel (%p196) target = $region12
    $region11: #{trompt_forward.1} parent=5 // pred_region
      %s200 = ssub.s32 %s12, 1
      // Predicated region
      $region13: #{trompt_forward.1} parent=11 // pred_check
        %p201 = pneg %p76
      $region14: #{trompt_forward.1} parent=11 // pred_check_branch
        %203 = sbr.rel (%p201) target = $region16
      $region15: #{trompt_forward.1} parent=11 // pred_region
        %p204 = scmp.lt.s32.totalorder %s21, 0
        %s205 = scalar_select %p204, %s21, 0
        %s206 = smul.addr %s205, 8
        %s207 = scalar_lea.vmem %s1, %s206
      $region16: #{trompt_forward.1} parent=11 // pred_fallthru
        _
      // Predicated region
      $region17: #{trompt_forward.1} parent=11 // pred_check
        %p208 = pneg %p97
      $region18: #{trompt_forward.1} parent=11 // pred_check_branch
        %210 = sbr.rel (%p208) target = $region20
      $region19: #{trompt_forward.1} parent=11 // pred_region
        _
      $region20: #{trompt_forward.1} parent=11 // pred_fallthru
        _
      // Predicated region
      $region21: #{trompt_forward.1} parent=11 // pred_check
        %p211 = pneg %p118
      $region22: #{trompt_forward.1} parent=11 // pred_check_branch
        %213 = sbr.rel (%p211) target = $region24
      $region23: #{trompt_forward.1} parent=11 // pred_region
        _
      $region24: #{trompt_forward.1} parent=11 // pred_fallthru
        _
      // Predicated region
      $region25: #{trompt_forward.1} parent=11 // pred_check
        %p214 = pneg %p139
      $region26: #{trompt_forward.1} parent=11 // pred_check_branch
        %216 = sbr.rel (%p214) target = $region28
      $region27: #{trompt_forward.1} parent=11 // pred_region
        _
      $region28: #{trompt_forward.1} parent=11 // pred_fallthru
        _
      // Predicated region
      $region29: #{trompt_forward.1} parent=11 // pred_check
        %p217 = pneg %p160
      $region30: #{trompt_forward.1} parent=11 // pred_check_branch
        %219 = sbr.rel (%p217) target = $region32
      $region31: #{trompt_forward.1} parent=11 // pred_region
        _
      $region32: #{trompt_forward.1} parent=11 // pred_fallthru
        _
    $region12: #{trompt_forward.1} parent=5 // pred_fallthru
      _
    %p220 = scmp.lt.s32.totalorder %s12, 3
    // Predicated region
    $region33: #{trompt_forward.1} parent=5 // pred_check
      %p221 = pneg %p220
    $region34: #{trompt_forward.1} parent=5 // pred_check_branch
      %223 = sbr.rel (%p221) target = $region36
    $region35: #{trompt_forward.1} parent=5 // pred_region
      // Predicated region
      $region37: #{trompt_forward.1} parent=35 // pred_check
        %p224 = pneg %p44
      $region38: #{trompt_forward.1} parent=35 // pred_check_branch
        %226 = sbr.rel (%p224) target = $region40
      $region39: #{trompt_forward.1} parent=35 // pred_region
        %p227 = scmp.lt.s32.totalorder %s20, 2
        %s228 = scalar_select %p227, %s20, 2
        %s229 = smul.addr %s228, 11
        %s230 = smul.addr %s229, 8
        %s231 = scalar_lea.vmem %s0, %s230
      $region40: #{trompt_forward.1} parent=35 // pred_fallthru
        _
    $region36: #{trompt_forward.1} parent=5 // pred_fallthru
      _
    %p232 = scmp.le.s32.totalorder 1, %s12
    %p233 = scmp.lt.s32.totalorder %s12, 4
    %p234 = pnand %p232, %p233
    %p235 = pneg %p234
    // Predicated region
    $region41: #{trompt_forward.1} parent=5 // pred_check
      _
    $region42: #{trompt_forward.1} parent=5 // pred_check_branch
      %237 = sbr.rel (%p234) target = $region44
    $region43: #{trompt_forward.1} parent=5 // pred_region
      %s238 = ssub.s32 %s12, 1
      %p239 = scmp.lt.s32.totalorder %s22, 2
      %s240 = scalar_select %p239, %s22, 2
      %s241 = smul.addr %s240, 11
      %s242 = smul.addr %s241, 8
      %s243 = scalar_lea.vmem %s0, %s242
      %p244 = pneg %p50
      %p245 = pneg %p47
      %p246 = scmp.lt.s32.totalorder %s21, 0
      %s247 = scalar_select %p246, %s21, 0
      %s248 = smul.addr %s247, 8
      %s249 = scalar_lea.vmem %s1, %s248
      %p250 = pneg %p76
      %p251 = pneg %p73
      %p252 = pneg %p97
      %p253 = pneg %p94
      %p254 = pneg %p118
      %p255 = pneg %p115
      %p256 = pneg %p139
      %p257 = pneg %p136
      %p258 = pneg %p160
      %p259 = pneg %p157
      %p260 = pneg %p186
      %p261 = pneg %p183
      %p262 = scmp.lt.s32.totalorder %s21, 0
      %s263 = scalar_select %p262, %s21, 0
      %s264 = smul.addr %s263, 8
      %s265 = scalar_lea.vmem %s6, %s264
      %p266 = scmp.lt.s32.totalorder %s22, 2
      %s267 = scalar_select %p266, %s22, 2
      %s268 = smul.addr %s267, 11
      %s269 = smul.addr %s268, 8
      %s270 = scalar_lea.vmem %s0, %s269
      %p271 = scmp.lt.s32.totalorder %s21, 0
      %s272 = scalar_select %p271, %s21, 0
      %s273 = smul.addr %s272, 8
      %s274 = scalar_lea.vmem %s1, %s273
      %p275 = scmp.lt.s32.totalorder %s21, 0
      %s276 = scalar_select %p275, %s21, 0
      %s277 = smul.addr %s276, 8
      %s278 = scalar_lea.vmem %s6, %s277
      %p279 = scmp.eq.s32.totalorder %s22, 0
      // Predicated region
      $region45: #{trompt_forward.1} parent=43 // pred_check
        %p280 = pneg %p279
      $region46: #{trompt_forward.1} parent=43 // pred_check_branch
        %282 = sbr.rel (%p280) target = $region48
      $region47: #{trompt_forward.1} parent=43 // pred_region
        %v283 = vld [vmem:[%s2] sm:$0xff]
        %vm284 = vcmask 261120
        %285 = vst.msk [vmem:[#allocation2] sm:$0xff] %vm284, %v283
        %286 = vst.msk [vmem:[#allocation2 + $0x8] sm:$0xff] %vm284, %v283
        %287 = vst.msk [vmem:[#allocation2 + $0x10] sm:$0xff] %vm284, %v283
        %288 = vst.msk [vmem:[#allocation2 + $0x18] sm:$0xff] %vm284, %v283
        %289 = vst.msk [vmem:[#allocation2 + $0x20] sm:$0xff] %vm284, %v283
        %290 = vst.msk [vmem:[#allocation2 + $0x28] sm:$0xff] %vm284, %v283
        %291 = vst.msk [vmem:[#allocation2 + $0x30] sm:$0xff] %vm284, %v283
        %292 = vst.msk [vmem:[#allocation2 + $0x38] sm:$0xff] %vm284, %v283
        %vm293 = vcmask 23552
        %294 = vst.msk [vmem:[%s278] sm:$0xff] %vm293, 0.0
      $region48: #{trompt_forward.1} parent=43 // pred_fallthru
        _
      %v295 = vld [vmem:[%s270] sm:$0xff]
      %v296 = vld [vmem:[%s270 + $0x8] sm:$0xff]
      %v297 = vld [vmem:[%s270 + $0x10] sm:$0xff]
      %v298 = vld [vmem:[%s270 + $0x18] sm:$0xff]
      %v299 = vld [vmem:[%s270 + $0x20] sm:$0xff]
      %v300 = vld [vmem:[%s270 + $0x28] sm:$0xff]
      %v301 = vld [vmem:[%s270 + $0x30] sm:$0xff]
      %v302 = vld [vmem:[%s270 + $0x38] sm:$0xff]
      %v303 = vld [vmem:[%s270 + $0x40] sm:$0xff]
      %v304 = vld [vmem:[%s270 + $0x48] sm:$0xff]
      %v305 = vld [vmem:[%s270 + $0x50] sm:$0x1]
      %v306 = vld [vmem:[%s270 + $0x51] sm:$0x1]
      %v307 = vld [vmem:[%s270 + $0x52] sm:$0x1]
      %v308 = vld [vmem:[%s274] sm:$0xff]
      %v309 = vlaneseq
      %v310 = vshrl.u32 %v309, 7
      %v311 = vsub.s32 0, %v310
      %v312 = vrot.slane %v305, %v311
      %vm313 = vcmask 64512
      %v315 = vsel %vm313, %v308, 0
      %317 = vmatprep.subr.mxu0 0.0
      %318 = vmatpush1.msra.mxu0 %v304
      %319 = vmatprep.subr.mxu0 0.0
      %320 = vmatpush1.msra.mxu0 0.0
      %321 = vmatprep.subr.mxu0 0.0
      %322 = vmatpush1.msra.mxu0 0.0
      %323 = vmatprep.subr.mxu0 0.0
      %324 = vmatpush1.msra.mxu0 0.0
      %325 = vmatprep.subr.mxu0 0.0
      %326 = vmatpush1.msra.mxu0 0.0
      %327 = vmatprep.subr.mxu0 0.0
      %328 = vmatpush1.msra.mxu0 0.0
      %329 = vmatprep.subr.mxu0 0.0
      %330 = vmatpush1.msra.mxu0 0.0
      %331 = vmatprep.subr.mxu0 0.0
      %332 = vmatpush1.msra.mxu0 0.0
      %333 = vmatprep.subr.mxu0 0.0
      %334 = vmatpush1.msra.mxu0 0.0
      %335 = vmatprep.subr.mxu0 0.0
      %336 = vmatpush1.msra.mxu0 0.0
      %337 = vmatprep.subr.mxu0 0.0
      %338 = vmatpush1.msra.mxu0 0.0
      %339 = vmatprep.subr.mxu0 0.0
      %340 = vmatpush1.msra.mxu0 0.0
      %341 = vmatprep.subr.mxu0 0.0
      %342 = vmatpush1.msra.mxu0 0.0
      %343 = vmatprep.subr.mxu0 0.0
      %344 = vmatpush1.msra.mxu0 0.0
      %345 = vmatprep.subr.mxu0 0.0
      %346 = vmatpush1.msra.mxu0 0.0
      %347 = vmatprep.subr.mxu0 0.0
      %348 = vmatpush1.msra.mxu0 0.0
      %349 = vmatprep.subr.mxu0 0.0
      %350 = vmatpush1.msra.mxu0 0.0
      %351 = vmatprep.subr.mxu0 0.0
      %352 = vmatpush1.msra.mxu0 0.0
      %353 = vmatprep.subr.mxu0 0.0
      %354 = vmatpush1.msra.mxu0 0.0
      %355 = vmatprep.subr.mxu0 0.0
      %356 = vmatpush1.msra.mxu0 0.0
      %357 = vmatprep.subr.mxu0 0.0
      %358 = vmatpush1.msra.mxu0 0.0
      %359 = vmatprep.subr.mxu0 0.0
      %360 = vmatpush1.msra.mxu0 0.0
      %361 = vmatprep.subr.mxu0 0.0
      %362 = vmatpush1.msra.mxu0 0.0
      %363 = vmatprep.subr.mxu0 0.0
      %364 = vmatpush1.msra.mxu0 0.0
      %365 = vmatprep.subr.mxu0 0.0
      %366 = vmatpush1.msra.mxu0 0.0
      %367 = vmatprep.subr.mxu0 0.0
      %368 = vmatpush1.msra.mxu0 0.0
      %369 = vmatprep.subr.mxu0 0.0
      %370 = vmatpush1.msra.mxu0 0.0
      %371 = vmatprep.subr.mxu0 0.0
      %372 = vmatpush1.msra.mxu0 0.0
      %373 = vmatprep.subr.mxu0 0.0
      %374 = vmatpush1.msra.mxu0 0.0
      %375 = vmatprep.subr.mxu0 0.0
      %376 = vmatpush1.msra.mxu0 0.0
      %377 = vmatprep.subr.mxu0 0.0
      %378 = vmatpush1.msra.mxu0 0.0
      %379 = vmatprep.subr.mxu0 0.0
      %380 = vmatpush1.msra.mxu0 0.0
      %381 = vmatprep.mubr.f32.mxu0 0.0
      %382 = vmatmul.mubr.f32.gmra.mrb[0].mxu0 %v315
      %v383 = vpop.f32.mrb[0].mxu0
      %v384 = vadd.f32 %v312, %v383
      %v385 = vpop.f32.mrb[0].mxu0
      %386 = vdwg.mxu0
      %v387 = vmax.f32 %v384, 0.0
      %v388 = vld [vmem:[%s3] sm:$0xff]
      %v389 = vld [vmem:[%s3 + $0x8] sm:$0xff]
      %v390 = vld [vmem:[%s3 + $0x10] sm:$0xff]
      %v391 = vld [vmem:[%s3 + $0x18] sm:$0xff]
      %v392 = vld [vmem:[%s3 + $0x20] sm:$0xff]
      %v393 = vld [vmem:[%s3 + $0x28] sm:$0xff]
      %v394 = vld [vmem:[%s3 + $0x30] sm:$0xff]
      %v395 = vld [vmem:[%s3 + $0x38] sm:$0xff]
      %v396 = vld [vmem:[%s3 + $0x40] sm:$0xff]
      %v397 = vld [vmem:[%s3 + $0x48] sm:$0xff]
      %v398 = vld [vmem:[%s3 + $0x50] sm:$0xff]
      %v399 = vld [vmem:[%s3 + $0x58] sm:$0xff]
      %v400 = vld [vmem:[%s3 + $0x60] sm:$0xff]
      %v401 = vld [vmem:[%s3 + $0x68] sm:$0xff]
      %v402 = vld [vmem:[%s3 + $0x70] sm:$0xff]
      %v403 = vld [vmem:[%s3 + $0x78] sm:$0xff]
      %404 = vmatprep.subr.mxu0 0.0
      %405 = vmatpush1.msra.mxu0 %v388
      %406 = vmatprep.subr.mxu0 0.0
      %407 = vmatpush1.msra.mxu0 %v389
      %408 = vmatprep.subr.mxu0 0.0
      %409 = vmatpush1.msra.mxu0 %v390
      %410 = vmatprep.subr.mxu0 0.0
      %411 = vmatpush1.msra.mxu0 %v391
      %412 = vmatprep.subr.mxu0 0.0
      %413 = vmatpush1.msra.mxu0 %v392
      %414 = vmatprep.subr.mxu0 0.0
      %415 = vmatpush1.msra.mxu0 %v393
      %416 = vmatprep.subr.mxu0 0.0
      %417 = vmatpush1.msra.mxu0 %v394
      %418 = vmatprep.subr.mxu0 0.0
      %419 = vmatpush1.msra.mxu0 %v395
      %420 = vmatprep.subr.mxu0 0.0
      %421 = vmatpush1.msra.mxu0 %v396
      %422 = vmatprep.subr.mxu0 0.0
      %423 = vmatpush1.msra.mxu0 %v397
      %424 = vmatprep.subr.mxu0 0.0
      %425 = vmatpush1.msra.mxu0 %v398
      %426 = vmatprep.subr.mxu0 0.0
      %427 = vmatpush1.msra.mxu0 %v399
      %428 = vmatprep.subr.mxu0 0.0
      %429 = vmatpush1.msra.mxu0 %v400
      %430 = vmatprep.subr.mxu0 0.0
      %431 = vmatpush1.msra.mxu0 %v401
      %432 = vmatprep.subr.mxu0 0.0
      %433 = vmatpush1.msra.mxu0 %v402
      %434 = vmatprep.subr.mxu0 0.0
      %435 = vmatpush1.msra.mxu0 %v403
      %436 = vmatprep.subr.mxu0 0.0
      %437 = vmatpush1.msra.mxu0 0.0
      %438 = vmatprep.subr.mxu0 0.0
      %439 = vmatpush1.msra.mxu0 0.0
      %440 = vmatprep.subr.mxu0 0.0
      %441 = vmatpush1.msra.mxu0 0.0
      %442 = vmatprep.subr.mxu0 0.0
      %443 = vmatpush1.msra.mxu0 0.0
      %444 = vmatprep.subr.mxu0 0.0
      %445 = vmatpush1.msra.mxu0 0.0
      %446 = vmatprep.subr.mxu0 0.0
      %447 = vmatpush1.msra.mxu0 0.0
      %448 = vmatprep.subr.mxu0 0.0
      %449 = vmatpush1.msra.mxu0 0.0
      %450 = vmatprep.subr.mxu0 0.0
      %451 = vmatpush1.msra.mxu0 0.0
      %452 = vmatprep.subr.mxu0 0.0
      %453 = vmatpush1.msra.mxu0 0.0
      %454 = vmatprep.subr.mxu0 0.0
      %455 = vmatpush1.msra.mxu0 0.0
      %456 = vmatprep.subr.mxu0 0.0
      %457 = vmatpush1.msra.mxu0 0.0
      %458 = vmatprep.subr.mxu0 0.0
      %459 = vmatpush1.msra.mxu0 0.0
      %460 = vmatprep.subr.mxu0 0.0
      %461 = vmatpush1.msra.mxu0 0.0
      %462 = vmatprep.subr.mxu0 0.0
      %463 = vmatpush1.msra.mxu0 0.0
      %464 = vmatprep.subr.mxu0 0.0
      %465 = vmatpush1.msra.mxu0 0.0
      %466 = vmatprep.subr.mxu0 0.0
      %467 = vmatpush1.msra.mxu0 0.0
      %468 = vmatprep.mubr.f32.mxu0 0.0
      %469 = vmatmul.mubr.f32.gmra.mrb[0].mxu0 %v387
      %v470 = vpop.f32.mrb[0].mxu0
      %v471 = vadd.f32 0.0, %v470
      %v472 = vpop.f32.mrb[0].mxu0
      %473 = vdwg.mxu0
      %v474 = vmul.f32 %v471, 0.03125
      %v475 = vmul.f32 %v387, %v387
      %476 = vmatprep.subr.mxu0 0.0
      %477 = vmatpush1.msra.mxu0 %v388
      %478 = vmatprep.subr.mxu0 0.0
      %479 = vmatpush1.msra.mxu0 %v389
      %480 = vmatprep.subr.mxu0 0.0
      %481 = vmatpush1.msra.mxu0 %v390
      %482 = vmatprep.subr.mxu0 0.0
      %483 = vmatpush1.msra.mxu0 %v391
      %484 = vmatprep.subr.mxu0 0.0
      %485 = vmatpush1.msra.mxu0 %v392
      %486 = vmatprep.subr.mxu0 0.0
      %487 = vmatpush1.msra.mxu0 %v393
      %488 = vmatprep.subr.mxu0 0.0
      %489 = vmatpush1.msra.mxu0 %v394
      %490 = vmatprep.subr.mxu0 0.0
      %491 = vmatpush1.msra.mxu0 %v395
      %492 = vmatprep.subr.mxu0 0.0
      %493 = vmatpush1.msra.mxu0 %v396
      %494 = vmatprep.subr.mxu0 0.0
      %495 = vmatpush1.msra.mxu0 %v397
      %496 = vmatprep.subr.mxu0 0.0
      %497 = vmatpush1.msra.mxu0 %v398
      %498 = vmatprep.subr.mxu0 0.0
      %499 = vmatpush1.msra.mxu0 %v399
      %500 = vmatprep.subr.mxu0 0.0
      %501 = vmatpush1.msra.mxu0 %v400
      %502 = vmatprep.subr.mxu0 0.0
      %503 = vmatpush1.msra.mxu0 %v401
      %504 = vmatprep.subr.mxu0 0.0
      %505 = vmatpush1.msra.mxu0 %v402
      %506 = vmatprep.subr.mxu0 0.0
      %507 = vmatpush1.msra.mxu0 %v403
      %508 = vmatprep.subr.mxu0 0.0
      %509 = vmatpush1.msra.mxu0 0.0
      %510 = vmatprep.subr.mxu0 0.0
      %511 = vmatpush1.msra.mxu0 0.0
      %512 = vmatprep.subr.mxu0 0.0
      %513 = vmatpush1.msra.mxu0 0.0
      %514 = vmatprep.subr.mxu0 0.0
      %515 = vmatpush1.msra.mxu0 0.0
      %516 = vmatprep.subr.mxu0 0.0
      %517 = vmatpush1.msra.mxu0 0.0
      %518 = vmatprep.subr.mxu0 0.0
      %519 = vmatpush1.msra.mxu0 0.0
      %520 = vmatprep.subr.mxu0 0.0
      %521 = vmatpush1.msra.mxu0 0.0
      %522 = vmatprep.subr.mxu0 0.0
      %523 = vmatpush1.msra.mxu0 0.0
      %524 = vmatprep.subr.mxu0 0.0
      %525 = vmatpush1.msra.mxu0 0.0
      %526 = vmatprep.subr.mxu0 0.0
      %527 = vmatpush1.msra.mxu0 0.0
      %528 = vmatprep.subr.mxu0 0.0
      %529 = vmatpush1.msra.mxu0 0.0
      %530 = vmatprep.subr.mxu0 0.0
      %531 = vmatpush1.msra.mxu0 0.0
      %532 = vmatprep.subr.mxu0 0.0
      %533 = vmatpush1.msra.mxu0 0.0
      %534 = vmatprep.subr.mxu0 0.0
      %535 = vmatpush1.msra.mxu0 0.0
      %536 = vmatprep.subr.mxu0 0.0
      %537 = vmatpush1.msra.mxu0 0.0
      %538 = vmatprep.subr.mxu0 0.0
      %539 = vmatpush1.msra.mxu0 0.0
      %540 = vmatprep.mubr.f32.mxu0 0.0
      %541 = vmatmul.mubr.f32.gmra.mrb[0].mxu0 %v475
      %v542 = vpop.f32.mrb[0].mxu0
      %v543 = vadd.f32 0.0, %v542
      %v544 = vpop.f32.mrb[0].mxu0
      %545 = vdwg.mxu0
      %v546 = vmul.f32 %v543, 0.03125
      %v547 = vmul.f32 %v474, %v474
      %v548 = vsub.f32 %v546, %v547
      %v549 = vsub.f32 %v387, %v474
      %v550 = vadd.f32 %v548, 1e-05
      %v551 = vrsqrt.pop %v550
      %v552 = vmul.f32 %v549, %v551
      %v553 = vlaneseq
      %v554 = vshrl.u32 %v553, 7
      %v555 = vsub.s32 0, %v554
      %v556 = vrot.slane %v306, %v555
      %v557 = vmul.f32 %v552, %v556
      %v558 = vlaneseq
      %v559 = vshrl.u32 %v558, 7
      %v560 = vsub.s32 0, %v559
      %v561 = vrot.slane %v307, %v560
      %v562 = vadd.f32 %v557, %v561
      %v564 = vcombine.high %v562, %v562
      %v566 = vunpack.c.l.s4 1966171168
      %v567 = vunpack.c.0.s8 %v566
      %v568 = vlaneseq
      %v569 = vshrl.u32 %v568, 7
      %v570 = vsub.s32 %v567, %v569
      %v571 = vrot.slane %v562, %v570
      %v573 = vunpack.c.l.s4 1966171168
      %v574 = vunpack.c.0.s8 %v573
      %v575 = vlaneseq
      %v576 = vshrl.u32 %v575, 7
      %v577 = vsub.s32 %v574, %v576
      %v578 = vrot.slane %v564, %v577
      %v579 = vcombine.high %v571, %v571
      %v580 = vcombine.high %v578, %v578
      %v582 = vunpack.c.l.s4 1966171168
      %v583 = vunpack.c.0.s8 %v582
      %v584 = vlaneseq
      %v585 = vshrl.u32 %v584, 7
      %v586 = vsub.s32 %v583, %v585
      %v587 = vrot.slane %v571, %v586
      %v589 = vunpack.c.l.s4 1966171168
      %v590 = vunpack.c.0.s8 %v589
      %v591 = vlaneseq
      %v592 = vshrl.u32 %v591, 7
      %v593 = vsub.s32 %v590, %v592
      %v594 = vrot.slane %v578, %v593
      %v596 = vunpack.c.l.s4 1966171168
      %v597 = vunpack.c.0.s8 %v596
      %v598 = vlaneseq
      %v599 = vshrl.u32 %v598, 7
      %v600 = vsub.s32 %v597, %v599
      %v601 = vrot.slane %v579, %v600
      %v603 = vunpack.c.l.s4 1966171168
      %v604 = vunpack.c.0.s8 %v603
      %v605 = vlaneseq
      %v606 = vshrl.u32 %v605, 7
      %v607 = vsub.s32 %v604, %v606
      %v608 = vrot.slane %v580, %v607
      %v609 = vcombine.high %v587, %v587
      %v610 = vcombine.high %v594, %v594
      %v611 = vcombine.high %v601, %v601
      %v612 = vcombine.high %v608, %v608
      %v613 = vlaneseq
      %v614 = vshrl.u32 %v613, 7
      %v615 = vsub.s32 0, %v614
      %v616 = vrot.slane %v587, %v615
      %v617 = vlaneseq
      %v618 = vshrl.u32 %v617, 7
      %v619 = vsub.s32 0, %v618
      %v620 = vrot.slane %v601, %v619
      %v621 = vlaneseq
      %v622 = vshrl.u32 %v621, 7
      %v623 = vsub.s32 0, %v622
      %v624 = vrot.slane %v609, %v623
      %v625 = vlaneseq
      %v626 = vshrl.u32 %v625, 7
      %v627 = vsub.s32 0, %v626
      %v628 = vrot.slane %v611, %v627
      %v629 = vlaneseq
      %v630 = vshrl.u32 %v629, 7
      %v631 = vsub.s32 0, %v630
      %v632 = vrot.slane %v594, %v631
      %v633 = vlaneseq
      %v634 = vshrl.u32 %v633, 7
      %v635 = vsub.s32 0, %v634
      %v636 = vrot.slane %v608, %v635
      %v637 = vlaneseq
      %v638 = vshrl.u32 %v637, 7
      %v639 = vsub.s32 0, %v638
      %v640 = vrot.slane %v610, %v639
      %v641 = vlaneseq
      %v642 = vshrl.u32 %v641, 7
      %v643 = vsub.s32 0, %v642
      %v644 = vrot.slane %v612, %v643
      %v653 = vmul.f32 %v616, %v295
      %v654 = vmul.f32 %v620, %v295
      %v655 = vmul.f32 %v624, %v295
      %v656 = vmul.f32 %v628, %v295
      %v657 = vmul.f32 %v632, %v295
      %v658 = vmul.f32 %v636, %v295
      %v659 = vmul.f32 %v640, %v295
      %v660 = vmul.f32 %v644, %v295
      %v661 = vadd.f32 %v653, %v296
      %v662 = vadd.f32 %v654, %v296
      %v663 = vadd.f32 %v655, %v296
      %v664 = vadd.f32 %v656, %v296
      %v665 = vadd.f32 %v657, %v296
      %v666 = vadd.f32 %v658, %v296
      %v667 = vadd.f32 %v659, %v296
      %v668 = vadd.f32 %v660, %v296
      %v669 = vmax.f32 %v661, 0.0
      %v670 = vmax.f32 %v662, 0.0
      %v671 = vmax.f32 %v663, 0.0
      %v672 = vmax.f32 %v664, 0.0
      %v673 = vmax.f32 %v665, 0.0
      %v674 = vmax.f32 %v666, 0.0
      %v675 = vmax.f32 %v667, 0.0
      %v676 = vmax.f32 %v668, 0.0
      %677 = vadd.xlane.f32.xlu0 %v669
      %v678 = vpop.xlane.xlu0 %677
      %679 = vadd.xlane.f32.xlu0 %v670
      %v680 = vpop.xlane.xlu0 %679
      %681 = vadd.xlane.f32.xlu0 %v671
      %v682 = vpop.xlane.xlu0 %681
      %683 = vadd.xlane.f32.xlu0 %v672
      %v684 = vpop.xlane.xlu0 %683
      %685 = vadd.xlane.f32.xlu0 %v673
      %v686 = vpop.xlane.xlu0 %685
      %687 = vadd.xlane.f32.xlu0 %v674
      %v688 = vpop.xlane.xlu0 %687
      %689 = vadd.xlane.f32.xlu0 %v675
      %v690 = vpop.xlane.xlu0 %689
      %691 = vadd.xlane.f32.xlu0 %v676
      %v692 = vpop.xlane.xlu0 %691
      %v693 = vmul.f32 %v669, %v669
      %v694 = vmul.f32 %v670, %v670
      %v695 = vmul.f32 %v671, %v671
      %v696 = vmul.f32 %v672, %v672
      %v697 = vmul.f32 %v673, %v673
      %v698 = vmul.f32 %v674, %v674
      %v699 = vmul.f32 %v675, %v675
      %v700 = vmul.f32 %v676, %v676
      %701 = vadd.xlane.f32.xlu0 %v693
      %v702 = vpop.xlane.xlu0 %701
      %703 = vadd.xlane.f32.xlu0 %v694
      %v704 = vpop.xlane.xlu0 %703
      %705 = vadd.xlane.f32.xlu0 %v695
      %v706 = vpop.xlane.xlu0 %705
      %707 = vadd.xlane.f32.xlu0 %v696
      %v708 = vpop.xlane.xlu0 %707
      %709 = vadd.xlane.f32.xlu0 %v697
      %v710 = vpop.xlane.xlu0 %709
      %711 = vadd.xlane.f32.xlu0 %v698
      %v712 = vpop.xlane.xlu0 %711
      %713 = vadd.xlane.f32.xlu0 %v699
      %v714 = vpop.xlane.xlu0 %713
      %715 = vadd.xlane.f32.xlu0 %v700
      %v716 = vpop.xlane.xlu0 %715
      %vm717 = vcmask 1043456
      %v718 = vsel %vm717, %v678, 0.0
      %v719 = vrot.slane %v718, 4
      %v720 = vadd.f32 %v718, %v719
      %v721 = vrot.slane %v720, 2
      %v722 = vadd.f32 %v720, %v721
      %v723 = vrot.slane %v722, 1
      %v724 = vadd.f32 %v722, %v723
      %v725 = vsel %vm717, %v680, 0.0
      %v726 = vrot.slane %v725, 4
      %v727 = vadd.f32 %v725, %v726
      %v728 = vrot.slane %v727, 2
      %v729 = vadd.f32 %v727, %v728
      %v730 = vrot.slane %v729, 1
      %v731 = vadd.f32 %v729, %v730
      %v732 = vsel %vm717, %v682, 0.0
      %v733 = vrot.slane %v732, 4
      %v734 = vadd.f32 %v732, %v733
      %v735 = vrot.slane %v734, 2
      %v736 = vadd.f32 %v734, %v735
      %v737 = vrot.slane %v736, 1
      %v738 = vadd.f32 %v736, %v737
      %v739 = vsel %vm717, %v684, 0.0
      %v740 = vrot.slane %v739, 4
      %v741 = vadd.f32 %v739, %v740
      %v742 = vrot.slane %v741, 2
      %v743 = vadd.f32 %v741, %v742
      %v744 = vrot.slane %v743, 1
      %v745 = vadd.f32 %v743, %v744
      %v746 = vsel %vm717, %v686, 0.0
      %v747 = vrot.slane %v746, 4
      %v748 = vadd.f32 %v746, %v747
      %v749 = vrot.slane %v748, 2
      %v750 = vadd.f32 %v748, %v749
      %v751 = vrot.slane %v750, 1
      %v752 = vadd.f32 %v750, %v751
      %v753 = vsel %vm717, %v688, 0.0
      %v754 = vrot.slane %v753, 4
      %v755 = vadd.f32 %v753, %v754
      %v756 = vrot.slane %v755, 2
      %v757 = vadd.f32 %v755, %v756
      %v758 = vrot.slane %v757, 1
      %v759 = vadd.f32 %v757, %v758
      %v760 = vsel %vm717, %v690, 0.0
      %v761 = vrot.slane %v760, 4
      %v762 = vadd.f32 %v760, %v761
      %v763 = vrot.slane %v762, 2
      %v764 = vadd.f32 %v762, %v763
      %v765 = vrot.slane %v764, 1
      %v766 = vadd.f32 %v764, %v765
      %v767 = vsel %vm717, %v692, 0.0
      %v768 = vrot.slane %v767, 4
      %v769 = vadd.f32 %v767, %v768
      %v770 = vrot.slane %v769, 2
      %v771 = vadd.f32 %v769, %v770
      %v772 = vrot.slane %v771, 1
      %v773 = vadd.f32 %v771, %v772
      %v774 = vmul.f32 %v724, 0.001953125
      %v775 = vmul.f32 %v731, 0.001953125
      %v776 = vmul.f32 %v738, 0.001953125
      %v777 = vmul.f32 %v745, 0.001953125
      %v778 = vmul.f32 %v752, 0.001953125
      %v779 = vmul.f32 %v759, 0.001953125
      %v780 = vmul.f32 %v766, 0.001953125
      %v781 = vmul.f32 %v773, 0.001953125
      %v790 = vrot.slane %v678, 4
      %v791 = vrot.slane %v680, 4
      %v792 = vrot.slane %v682, 4
      %v793 = vrot.slane %v684, 4
      %v794 = vrot.slane %v686, 4
      %v795 = vrot.slane %v688, 4
      %v796 = vrot.slane %v690, 4
      %v797 = vrot.slane %v692, 4
      %v806 = vsel %vm717, %v790, 0.0
      %v807 = vrot.slane %v806, 4
      %v808 = vadd.f32 %v806, %v807
      %v809 = vrot.slane %v808, 2
      %v810 = vadd.f32 %v808, %v809
      %v811 = vrot.slane %v810, 1
      %v812 = vadd.f32 %v810, %v811
      %v813 = vsel %vm717, %v791, 0.0
      %v814 = vrot.slane %v813, 4
      %v815 = vadd.f32 %v813, %v814
      %v816 = vrot.slane %v815, 2
      %v817 = vadd.f32 %v815, %v816
      %v818 = vrot.slane %v817, 1
      %v819 = vadd.f32 %v817, %v818
      %v820 = vsel %vm717, %v792, 0.0
      %v821 = vrot.slane %v820, 4
      %v822 = vadd.f32 %v820, %v821
      %v823 = vrot.slane %v822, 2
      %v824 = vadd.f32 %v822, %v823
      %v825 = vrot.slane %v824, 1
      %v826 = vadd.f32 %v824, %v825
      %v827 = vsel %vm717, %v793, 0.0
      %v828 = vrot.slane %v827, 4
      %v829 = vadd.f32 %v827, %v828
      %v830 = vrot.slane %v829, 2
      %v831 = vadd.f32 %v829, %v830
      %v832 = vrot.slane %v831, 1
      %v833 = vadd.f32 %v831, %v832
      %v834 = vsel %vm717, %v794, 0.0
      %v835 = vrot.slane %v834, 4
      %v836 = vadd.f32 %v834, %v835
      %v837 = vrot.slane %v836, 2
      %v838 = vadd.f32 %v836, %v837
      %v839 = vrot.slane %v838, 1
      %v840 = vadd.f32 %v838, %v839
      %v841 = vsel %vm717, %v795, 0.0
      %v842 = vrot.slane %v841, 4
      %v843 = vadd.f32 %v841, %v842
      %v844 = vrot.slane %v843, 2
      %v845 = vadd.f32 %v843, %v844
      %v846 = vrot.slane %v845, 1
      %v847 = vadd.f32 %v845, %v846
      %v848 = vsel %vm717, %v796, 0.0
      %v849 = vrot.slane %v848, 4
      %v850 = vadd.f32 %v848, %v849
      %v851 = vrot.slane %v850, 2
      %v852 = vadd.f32 %v850, %v851
      %v853 = vrot.slane %v852, 1
      %v854 = vadd.f32 %v852, %v853
      %v855 = vsel %vm717, %v797, 0.0
      %v856 = vrot.slane %v855, 4
      %v857 = vadd.f32 %v855, %v856
      %v858 = vrot.slane %v857, 2
      %v859 = vadd.f32 %v857, %v858
      %v860 = vrot.slane %v859, 1
      %v861 = vadd.f32 %v859, %v860
      %v862 = vmul.f32 %v812, 0.001953125
      %v863 = vmul.f32 %v819, 0.001953125
      %v864 = vmul.f32 %v826, 0.001953125
      %v865 = vmul.f32 %v833, 0.001953125
      %v866 = vmul.f32 %v840, 0.001953125
      %v867 = vmul.f32 %v847, 0.001953125
      %v868 = vmul.f32 %v854, 0.001953125
      %v869 = vmul.f32 %v861, 0.001953125
      %v870 = vsel %vm717, %v702, 0.0
      %v871 = vrot.slane %v870, 4
      %v872 = vadd.f32 %v870, %v871
      %v873 = vrot.slane %v872, 2
      %v874 = vadd.f32 %v872, %v873
      %v875 = vrot.slane %v874, 1
      %v876 = vadd.f32 %v874, %v875
      %v877 = vsel %vm717, %v704, 0.0
      %v878 = vrot.slane %v877, 4
      %v879 = vadd.f32 %v877, %v878
      %v880 = vrot.slane %v879, 2
      %v881 = vadd.f32 %v879, %v880
      %v882 = vrot.slane %v881, 1
      %v883 = vadd.f32 %v881, %v882
      %v884 = vsel %vm717, %v706, 0.0
      %v885 = vrot.slane %v884, 4
      %v886 = vadd.f32 %v884, %v885
      %v887 = vrot.slane %v886, 2
      %v888 = vadd.f32 %v886, %v887
      %v889 = vrot.slane %v888, 1
      %v890 = vadd.f32 %v888, %v889
      %v891 = vsel %vm717, %v708, 0.0
      %v892 = vrot.slane %v891, 4
      %v893 = vadd.f32 %v891, %v892
      %v894 = vrot.slane %v893, 2
      %v895 = vadd.f32 %v893, %v894
      %v896 = vrot.slane %v895, 1
      %v897 = vadd.f32 %v895, %v896
      %v898 = vsel %vm717, %v710, 0.0
      %v899 = vrot.slane %v898, 4
      %v900 = vadd.f32 %v898, %v899
      %v901 = vrot.slane %v900, 2
      %v902 = vadd.f32 %v900, %v901
      %v903 = vrot.slane %v902, 1
      %v904 = vadd.f32 %v902, %v903
      %v905 = vsel %vm717, %v712, 0.0
      %v906 = vrot.slane %v905, 4
      %v907 = vadd.f32 %v905, %v906
      %v908 = vrot.slane %v907, 2
      %v909 = vadd.f32 %v907, %v908
      %v910 = vrot.slane %v909, 1
      %v911 = vadd.f32 %v909, %v910
      %v912 = vsel %vm717, %v714, 0.0
      %v913 = vrot.slane %v912, 4
      %v914 = vadd.f32 %v912, %v913
      %v915 = vrot.slane %v914, 2
      %v916 = vadd.f32 %v914, %v915
      %v917 = vrot.slane %v916, 1
      %v918 = vadd.f32 %v916, %v917
      %v919 = vsel %vm717, %v716, 0.0
      %v920 = vrot.slane %v919, 4
      %v921 = vadd.f32 %v919, %v920
      %v922 = vrot.slane %v921, 2
      %v923 = vadd.f32 %v921, %v922
      %v924 = vrot.slane %v923, 1
      %v925 = vadd.f32 %v923, %v924
      %v926 = vmul.f32 %v876, 0.001953125
      %v927 = vmul.f32 %v883, 0.001953125
      %v928 = vmul.f32 %v890, 0.001953125
      %v929 = vmul.f32 %v897, 0.001953125
      %v930 = vmul.f32 %v904, 0.001953125
      %v931 = vmul.f32 %v911, 0.001953125
      %v932 = vmul.f32 %v918, 0.001953125
      %v933 = vmul.f32 %v925, 0.001953125
      %v942 = vrot.slane %v702, 4
      %v943 = vrot.slane %v704, 4
      %v944 = vrot.slane %v706, 4
      %v945 = vrot.slane %v708, 4
      %v946 = vrot.slane %v710, 4
      %v947 = vrot.slane %v712, 4
      %v948 = vrot.slane %v714, 4
      %v949 = vrot.slane %v716, 4
      %v958 = vsel %vm717, %v942, 0.0
      %v959 = vrot.slane %v958, 4
      %v960 = vadd.f32 %v958, %v959
      %v961 = vrot.slane %v960, 2
      %v962 = vadd.f32 %v960, %v961
      %v963 = vrot.slane %v962, 1
      %v964 = vadd.f32 %v962, %v963
      %v965 = vsel %vm717, %v943, 0.0
      %v966 = vrot.slane %v965, 4
      %v967 = vadd.f32 %v965, %v966
      %v968 = vrot.slane %v967, 2
      %v969 = vadd.f32 %v967, %v968
      %v970 = vrot.slane %v969, 1
      %v971 = vadd.f32 %v969, %v970
      %v972 = vsel %vm717, %v944, 0.0
      %v973 = vrot.slane %v972, 4
      %v974 = vadd.f32 %v972, %v973
      %v975 = vrot.slane %v974, 2
      %v976 = vadd.f32 %v974, %v975
      %v977 = vrot.slane %v976, 1
      %v978 = vadd.f32 %v976, %v977
      %v979 = vsel %vm717, %v945, 0.0
      %v980 = vrot.slane %v979, 4
      %v981 = vadd.f32 %v979, %v980
      %v982 = vrot.slane %v981, 2
      %v983 = vadd.f32 %v981, %v982
      %v984 = vrot.slane %v983, 1
      %v985 = vadd.f32 %v983, %v984
      %v986 = vsel %vm717, %v946, 0.0
      %v987 = vrot.slane %v986, 4
      %v988 = vadd.f32 %v986, %v987
      %v989 = vrot.slane %v988, 2
      %v990 = vadd.f32 %v988, %v989
      %v991 = vrot.slane %v990, 1
      %v992 = vadd.f32 %v990, %v991
      %v993 = vsel %vm717, %v947, 0.0
      %v994 = vrot.slane %v993, 4
      %v995 = vadd.f32 %v993, %v994
      %v996 = vrot.slane %v995, 2
      %v997 = vadd.f32 %v995, %v996
      %v998 = vrot.slane %v997, 1
      %v999 = vadd.f32 %v997, %v998
      %v1000 = vsel %vm717, %v948, 0.0
      %v1001 = vrot.slane %v1000, 4
      %v1002 = vadd.f32 %v1000, %v1001
      %v1003 = vrot.slane %v1002, 2
      %v1004 = vadd.f32 %v1002, %v1003
      %v1005 = vrot.slane %v1004, 1
      %v1006 = vadd.f32 %v1004, %v1005
      %v1007 = vsel %vm717, %v949, 0.0
      %v1008 = vrot.slane %v1007, 4
      %v1009 = vadd.f32 %v1007, %v1008
      %v1010 = vrot.slane %v1009, 2
      %v1011 = vadd.f32 %v1009, %v1010
      %v1012 = vrot.slane %v1011, 1
      %v1013 = vadd.f32 %v1011, %v1012
      %v1014 = vmul.f32 %v964, 0.001953125
      %v1015 = vmul.f32 %v971, 0.001953125
      %v1016 = vmul.f32 %v978, 0.001953125
      %v1017 = vmul.f32 %v985, 0.001953125
      %v1018 = vmul.f32 %v992, 0.001953125
      %v1019 = vmul.f32 %v999, 0.001953125
      %v1020 = vmul.f32 %v1006, 0.001953125
      %v1021 = vmul.f32 %v1013, 0.001953125
      %v1022 = vlaneseq
      %v1023 = vshrl.u32 %v1022, 7
      %vm1024 = vcmp.lt.s32.totalorder %v1023, 4
      %v1025 = vsel %vm1024, 1, 0
      %vm1026 = vcmp.eq.s32.totalorder %v1025, 1
      %v1027 = vsel %vm1026, %v774, %v862
      %v1028 = vsel %vm1026, %v775, %v863
      %v1029 = vsel %vm1026, %v776, %v864
      %v1030 = vsel %vm1026, %v777, %v865
      %v1031 = vsel %vm1026, %v778, %v866
      %v1032 = vsel %vm1026, %v779, %v867
      %v1033 = vsel %vm1026, %v780, %v868
      %v1034 = vsel %vm1026, %v781, %v869
      %v1035 = vmul.f32 %v774, %v774
      %v1036 = vmul.f32 %v775, %v775
      %v1037 = vmul.f32 %v776, %v776
      %v1038 = vmul.f32 %v777, %v777
      %v1039 = vmul.f32 %v778, %v778
      %v1040 = vmul.f32 %v779, %v779
      %v1041 = vmul.f32 %v780, %v780
      %v1042 = vmul.f32 %v781, %v781
      %v1043 = vsub.f32 %v926, %v1035
      %v1044 = vsub.f32 %v927, %v1036
      %v1045 = vsub.f32 %v928, %v1037
      %v1046 = vsub.f32 %v929, %v1038
      %v1047 = vsub.f32 %v930, %v1039
      %v1048 = vsub.f32 %v931, %v1040
      %v1049 = vsub.f32 %v932, %v1041
      %v1050 = vsub.f32 %v933, %v1042
      %v1051 = vmul.f32 %v862, %v862
      %v1052 = vmul.f32 %v863, %v863
      %v1053 = vmul.f32 %v864, %v864
      %v1054 = vmul.f32 %v865, %v865
      %v1055 = vmul.f32 %v866, %v866
      %v1056 = vmul.f32 %v867, %v867
      %v1057 = vmul.f32 %v868, %v868
      %v1058 = vmul.f32 %v869, %v869
      %v1059 = vsub.f32 %v1014, %v1051
      %v1060 = vsub.f32 %v1015, %v1052
      %v1061 = vsub.f32 %v1016, %v1053
      %v1062 = vsub.f32 %v1017, %v1054
      %v1063 = vsub.f32 %v1018, %v1055
      %v1064 = vsub.f32 %v1019, %v1056
      %v1065 = vsub.f32 %v1020, %v1057
      %v1066 = vsub.f32 %v1021, %v1058
      %v1067 = vsel %vm1026, %v1043, %v1059
      %v1068 = vsel %vm1026, %v1044, %v1060
      %v1069 = vsel %vm1026, %v1045, %v1061
      %v1070 = vsel %vm1026, %v1046, %v1062
      %v1071 = vsel %vm1026, %v1047, %v1063
      %v1072 = vsel %vm1026, %v1048, %v1064
      %v1073 = vsel %vm1026, %v1049, %v1065
      %v1074 = vsel %vm1026, %v1050, %v1066
      %v1075 = vsub.f32 %v669, %v1027
      %v1076 = vsub.f32 %v670, %v1028
      %v1077 = vsub.f32 %v671, %v1029
      %v1078 = vsub.f32 %v672, %v1030
      %v1079 = vsub.f32 %v673, %v1031
      %v1080 = vsub.f32 %v674, %v1032
      %v1081 = vsub.f32 %v675, %v1033
      %v1082 = vsub.f32 %v676, %v1034
      %v1083 = vadd.f32 %v1067, 1e-05
      %v1084 = vadd.f32 %v1068, 1e-05
      %v1085 = vadd.f32 %v1069, 1e-05
      %v1086 = vadd.f32 %v1070, 1e-05
      %v1087 = vadd.f32 %v1071, 1e-05
      %v1088 = vadd.f32 %v1072, 1e-05
      %v1089 = vadd.f32 %v1073, 1e-05
      %v1090 = vadd.f32 %v1074, 1e-05
      %v1091 = vrsqrt.pop %v1083
      %v1092 = vrsqrt.pop %v1084
      %v1093 = vrsqrt.pop %v1085
      %v1094 = vrsqrt.pop %v1086
      %v1095 = vrsqrt.pop %v1087
      %v1096 = vrsqrt.pop %v1088
      %v1097 = vrsqrt.pop %v1089
      %v1098 = vrsqrt.pop %v1090
      %v1099 = vmul.f32 %v1075, %v1091
      %v1100 = vmul.f32 %v1076, %v1092
      %v1101 = vmul.f32 %v1077, %v1093
      %v1102 = vmul.f32 %v1078, %v1094
      %v1103 = vmul.f32 %v1079, %v1095
      %v1104 = vmul.f32 %v1080, %v1096
      %v1105 = vmul.f32 %v1081, %v1097
      %v1106 = vmul.f32 %v1082, %v1098
      %v1107 = vmul.f32 %v1099, %v297
      %v1108 = vmul.f32 %v1100, %v297
      %v1109 = vmul.f32 %v1101, %v297
      %v1110 = vmul.f32 %v1102, %v297
      %v1111 = vmul.f32 %v1103, %v297
      %v1112 = vmul.f32 %v1104, %v297
      %v1113 = vmul.f32 %v1105, %v297
      %v1114 = vmul.f32 %v1106, %v297
      %v1115 = vadd.f32 %v1107, %v298
      %v1116 = vadd.f32 %v1108, %v298
      %v1117 = vadd.f32 %v1109, %v298
      %v1118 = vadd.f32 %v1110, %v298
      %v1119 = vadd.f32 %v1111, %v298
      %v1120 = vadd.f32 %v1112, %v298
      %v1121 = vadd.f32 %v1113, %v298
      %v1122 = vadd.f32 %v1114, %v298
      %v1123 = vadd.f32 %v616, %v1115
      %v1124 = vadd.f32 %v620, %v1116
      %v1125 = vadd.f32 %v624, %v1117
      %v1126 = vadd.f32 %v628, %v1118
      %v1127 = vadd.f32 %v632, %v1119
      %v1128 = vadd.f32 %v636, %v1120
      %v1129 = vadd.f32 %v640, %v1121
      %v1130 = vadd.f32 %v644, %v1122
      %v1131 = vld [vmem:[#allocation2] sm:$0xff]
      %v1132 = vld [vmem:[#allocation2 + $0x8] sm:$0xff]
      %v1133 = vld [vmem:[#allocation2 + $0x10] sm:$0xff]
      %v1134 = vld [vmem:[#allocation2 + $0x18] sm:$0xff]
      %v1135 = vld [vmem:[#allocation2 + $0x20] sm:$0xff]
      %v1136 = vld [vmem:[#allocation2 + $0x28] sm:$0xff]
      %v1137 = vld [vmem:[#allocation2 + $0x30] sm:$0xff]
      %v1138 = vld [vmem:[#allocation2 + $0x38] sm:$0xff]
      %vm1139 = vcmask 261120
      %v1141 = vsel %vm1139, %v1131, 0
      %v1144 = vsel %vm1139, %v1132, 0
      %v1147 = vsel %vm1139, %v1133, 0
      %v1150 = vsel %vm1139, %v1134, 0
      %v1153 = vsel %vm1139, %v1135, 0
      %v1156 = vsel %vm1139, %v1136, 0
      %v1159 = vsel %vm1139, %v1137, 0
      %v1162 = vsel %vm1139, %v1138, 0
      %1164 = vmatprep.subr.mxu0 0.0
      %1165 = vmatpush1.msra.mxu0 %v300
      %1166 = vmatprep.subr.mxu0 0.0
      %1167 = vmatpush1.msra.mxu0 %v301
      %1168 = vmatprep.subr.mxu0 0.0
      %1169 = vmatpush1.msra.mxu0 %v302
      %1170 = vmatprep.subr.mxu0 0.0
      %1171 = vmatpush1.msra.mxu0 %v303
      %1172 = vmatprep.subr.mxu0 0.0
      %1173 = vmatpush1.msra.mxu0 0.0
      %1174 = vmatprep.subr.mxu0 0.0
      %1175 = vmatpush1.msra.mxu0 0.0
      %1176 = vmatprep.subr.mxu0 0.0
      %1177 = vmatpush1.msra.mxu0 0.0
      %1178 = vmatprep.subr.mxu0 0.0
      %1179 = vmatpush1.msra.mxu0 0.0
      %1180 = vmatprep.subr.mxu0 0.0
      %1181 = vmatpush1.msra.mxu0 0.0
      %1182 = vmatprep.subr.mxu0 0.0
      %1183 = vmatpush1.msra.mxu0 0.0
      %1184 = vmatprep.subr.mxu0 0.0
      %1185 = vmatpush1.msra.mxu0 0.0
      %1186 = vmatprep.subr.mxu0 0.0
      %1187 = vmatpush1.msra.mxu0 0.0
      %1188 = vmatprep.subr.mxu0 0.0
      %1189 = vmatpush1.msra.mxu0 0.0
      %1190 = vmatprep.subr.mxu0 0.0
      %1191 = vmatpush1.msra.mxu0 0.0
      %1192 = vmatprep.subr.mxu0 0.0
      %1193 = vmatpush1.msra.mxu0 0.0
      %1194 = vmatprep.subr.mxu0 0.0
      %1195 = vmatpush1.msra.mxu0 0.0
      %1196 = vmatprep.subr.mxu0 0.0
      %1197 = vmatpush1.msra.mxu0 0.0
      %1198 = vmatprep.subr.mxu0 0.0
      %1199 = vmatpush1.msra.mxu0 0.0
      %1200 = vmatprep.subr.mxu0 0.0
      %1201 = vmatpush1.msra.mxu0 0.0
      %1202 = vmatprep.subr.mxu0 0.0
      %1203 = vmatpush1.msra.mxu0 0.0
      %1204 = vmatprep.subr.mxu0 0.0
      %1205 = vmatpush1.msra.mxu0 0.0
      %1206 = vmatprep.subr.mxu0 0.0
      %1207 = vmatpush1.msra.mxu0 0.0
      %1208 = vmatprep.subr.mxu0 0.0
      %1209 = vmatpush1.msra.mxu0 0.0
      %1210 = vmatprep.subr.mxu0 0.0
      %1211 = vmatpush1.msra.mxu0 0.0
      %1212 = vmatprep.subr.mxu0 0.0
      %1213 = vmatpush1.msra.mxu0 0.0
      %1214 = vmatprep.subr.mxu0 0.0
      %1215 = vmatpush1.msra.mxu0 0.0
      %1216 = vmatprep.subr.mxu0 0.0
      %1217 = vmatpush1.msra.mxu0 0.0
      %1218 = vmatprep.subr.mxu0 0.0
      %1219 = vmatpush1.msra.mxu0 0.0
      %1220 = vmatprep.subr.mxu0 0.0
      %1221 = vmatpush1.msra.mxu0 0.0
      %1222 = vmatprep.subr.mxu0 0.0
      %1223 = vmatpush1.msra.mxu0 0.0
      %1224 = vmatprep.subr.mxu0 0.0
      %1225 = vmatpush1.msra.mxu0 0.0
      %1226 = vmatprep.subr.mxu0 0.0
      %1227 = vmatpush1.msra.mxu0 0.0
      %1228 = vmatprep.mubr.f32.mxu0 0.0
      %1229 = vmatmul.mubr.f32.gmra.mrb[0].mxu0 %v1141
      %v1230 = vpop.f32.mrb[0].mxu0
      %v1231 = vadd.f32 0.0, %v1230
      %v1232 = vpop.f32.mrb[0].mxu0
      %1233 = vmatprep.mubr.f32.mxu0 0.0
      %1234 = vmatmul.mubr.f32.gmra.mrb[0].mxu0 %v1144
      %v1235 = vpop.f32.mrb[0].mxu0
      %v1236 = vadd.f32 0.0, %v1235
      %v1237 = vpop.f32.mrb[0].mxu0
      %1238 = vmatprep.mubr.f32.mxu0 0.0
      %1239 = vmatmul.mubr.f32.gmra.mrb[0].mxu0 %v1147
      %v1240 = vpop.f32.mrb[0].mxu0
      %v1241 = vadd.f32 0.0, %v1240
      %v1242 = vpop.f32.mrb[0].mxu0
      %1243 = vmatprep.mubr.f32.mxu0 0.0
      %1244 = vmatmul.mubr.f32.gmra.mrb[0].mxu0 %v1150
      %v1245 = vpop.f32.mrb[0].mxu0
      %v1246 = vadd.f32 0.0, %v1245
      %v1247 = vpop.f32.mrb[0].mxu0
      %1248 = vmatprep.mubr.f32.mxu0 0.0
      %1249 = vmatmul.mubr.f32.gmra.mrb[0].mxu0 %v1153
      %v1250 = vpop.f32.mrb[0].mxu0
      %v1251 = vadd.f32 0.0, %v1250
      %v1252 = vpop.f32.mrb[0].mxu0
      %1253 = vmatprep.mubr.f32.mxu0 0.0
      %1254 = vmatmul.mubr.f32.gmra.mrb[0].mxu0 %v1156
      %v1255 = vpop.f32.mrb[0].mxu0
      %v1256 = vadd.f32 0.0, %v1255
      %v1257 = vpop.f32.mrb[0].mxu0
      %1258 = vmatprep.mubr.f32.mxu0 0.0
      %1259 = vmatmul.mubr.f32.gmra.mrb[0].mxu0 %v1159
      %v1260 = vpop.f32.mrb[0].mxu0
      %v1261 = vadd.f32 0.0, %v1260
      %v1262 = vpop.f32.mrb[0].mxu0
      %1263 = vmatprep.mubr.f32.mxu0 0.0
      %1264 = vmatmul.mubr.f32.gmra.mrb[0].mxu0 %v1162
      %v1265 = vpop.f32.mrb[0].mxu0
      %v1266 = vadd.f32 0.0, %v1265
      %v1267 = vpop.f32.mrb[0].mxu0
      %1268 = vdwg.mxu0
      %v1269 = vadd.f32 %v1231, %v299
      %v1270 = vadd.f32 %v1236, %v299
      %v1271 = vadd.f32 %v1241, %v299
      %v1272 = vadd.f32 %v1246, %v299
      %v1273 = vadd.f32 %v1251, %v299
      %v1274 = vadd.f32 %v1256, %v299
      %v1275 = vadd.f32 %v1261, %v299
      %v1276 = vadd.f32 %v1266, %v299
      %1277 = vmax.xlane.f32.xlu0 %v1269
      %v1278 = vpop.xlane.xlu0 %1277
      %1279 = vmax.xlane.f32.xlu0 %v1270
      %v1280 = vpop.xlane.xlu0 %1279
      %1281 = vmax.xlane.f32.xlu0 %v1271
      %v1282 = vpop.xlane.xlu0 %1281
      %1283 = vmax.xlane.f32.xlu0 %v1272
      %v1284 = vpop.xlane.xlu0 %1283
      %1285 = vmax.xlane.f32.xlu0 %v1273
      %v1286 = vpop.xlane.xlu0 %1285
      %1287 = vmax.xlane.f32.xlu0 %v1274
      %v1288 = vpop.xlane.xlu0 %1287
      %1289 = vmax.xlane.f32.xlu0 %v1275
      %v1290 = vpop.xlane.xlu0 %1289
      %1291 = vmax.xlane.f32.xlu0 %v1276
      %v1292 = vpop.xlane.xlu0 %1291
      %v1293 = vsub.f32 %v1269, %v1278
      %v1294 = vsub.f32 %v1270, %v1280
      %v1295 = vsub.f32 %v1271, %v1282
      %v1296 = vsub.f32 %v1272, %v1284
      %v1297 = vsub.f32 %v1273, %v1286
      %v1298 = vsub.f32 %v1274, %v1288
      %v1299 = vsub.f32 %v1275, %v1290
      %v1300 = vsub.f32 %v1276, %v1292
      %v1301 = vmul.f32 %v1293, 1.442695
      %v1302 = vpow.pop %v1301
      %v1303 = vmul.f32 %v1294, 1.442695
      %v1304 = vpow.pop %v1303
      %v1305 = vmul.f32 %v1295, 1.442695
      %v1306 = vpow.pop %v1305
      %v1307 = vmul.f32 %v1296, 1.442695
      %v1308 = vpow.pop %v1307
      %v1309 = vmul.f32 %v1297, 1.442695
      %v1310 = vpow.pop %v1309
      %v1311 = vmul.f32 %v1298, 1.442695
      %v1312 = vpow.pop %v1311
      %v1313 = vmul.f32 %v1299, 1.442695
      %v1314 = vpow.pop %v1313
      %v1315 = vmul.f32 %v1300, 1.442695
      %v1316 = vpow.pop %v1315
      %1317 = vadd.xlane.f32.xlu0 %v1302
      %v1318 = vpop.xlane.xlu0 %1317
      %1319 = vadd.xlane.f32.xlu0 %v1304
      %v1320 = vpop.xlane.xlu0 %1319
      %1321 = vadd.xlane.f32.xlu0 %v1306
      %v1322 = vpop.xlane.xlu0 %1321
      %1323 = vadd.xlane.f32.xlu0 %v1308
      %v1324 = vpop.xlane.xlu0 %1323
      %1325 = vadd.xlane.f32.xlu0 %v1310
      %v1326 = vpop.xlane.xlu0 %1325
      %1327 = vadd.xlane.f32.xlu0 %v1312
      %v1328 = vpop.xlane.xlu0 %1327
      %1329 = vadd.xlane.f32.xlu0 %v1314
      %v1330 = vpop.xlane.xlu0 %1329
      %1331 = vadd.xlane.f32.xlu0 %v1316
      %v1332 = vpop.xlane.xlu0 %1331
      %v1333 = vrcp.pop %v1318
      %v1334 = vrcp.pop %v1320
      %v1335 = vrcp.pop %v1322
      %v1336 = vrcp.pop %v1324
      %v1337 = vrcp.pop %v1326
      %v1338 = vrcp.pop %v1328
      %v1339 = vrcp.pop %v1330
      %v1340 = vrcp.pop %v1332
      %v1341 = vmul.f32 %v1333, 32.0
      %v1342 = vmul.f32 %v1334, 32.0
      %v1343 = vmul.f32 %v1335, 32.0
      %v1344 = vmul.f32 %v1336, 32.0
      %v1345 = vmul.f32 %v1337, 32.0
      %v1346 = vmul.f32 %v1338, 32.0
      %v1347 = vmul.f32 %v1339, 32.0
      %v1348 = vmul.f32 %v1340, 32.0
      %v1349 = vmul.f32 %v1302, %v1341
      %v1350 = vmul.f32 %v1304, %v1342
      %v1351 = vmul.f32 %v1306, %v1343
      %v1352 = vmul.f32 %v1308, %v1344
      %v1353 = vmul.f32 %v1310, %v1345
      %v1354 = vmul.f32 %v1312, %v1346
      %v1355 = vmul.f32 %v1314, %v1347
      %v1356 = vmul.f32 %v1316, %v1348
      %v1357 = vmul.f32 %v1349, %v1123
      %v1358 = vmul.f32 %v1350, %v1124
      %v1359 = vmul.f32 %v1351, %v1125
      %v1360 = vmul.f32 %v1352, %v1126
      %v1361 = vmul.f32 %v1353, %v1127
      %v1362 = vmul.f32 %v1354, %v1128
      %v1363 = vmul.f32 %v1355, %v1129
      %v1364 = vmul.f32 %v1356, %v1130
      %v1365 = vld [vmem:[%s4] sm:$0xff]
      %v1366 = vld [vmem:[%s4 + $0x8] sm:$0xff]
      %v1367 = vld [vmem:[%s4 + $0x10] sm:$0xff]
      %v1368 = vld [vmem:[%s4 + $0x18] sm:$0xff]
      %v1369 = vld [vmem:[%s4 + $0x20] sm:$0xff]
      %v1370 = vld [vmem:[%s4 + $0x28] sm:$0xff]
      %v1371 = vld [vmem:[%s4 + $0x30] sm:$0xff]
      %v1372 = vld [vmem:[%s4 + $0x38] sm:$0xff]
      %v1373 = vld [vmem:[%s4 + $0x40] sm:$0xff]
      %v1374 = vld [vmem:[%s4 + $0x48] sm:$0xff]
      %v1375 = vld [vmem:[%s4 + $0x50] sm:$0xff]
      %v1376 = vld [vmem:[%s4 + $0x58] sm:$0xff]
      %v1377 = vld [vmem:[%s4 + $0x60] sm:$0xff]
      %v1378 = vld [vmem:[%s4 + $0x68] sm:$0xff]
      %v1379 = vld [vmem:[%s4 + $0x70] sm:$0xff]
      %v1380 = vld [vmem:[%s4 + $0x78] sm:$0xff]
      %1381 = vmatprep.subr.mxu0 0.0
      %1382 = vmatpush1.msra.mxu0 %v1365
      %1383 = vmatprep.subr.mxu0 0.0
      %1384 = vmatpush1.msra.mxu0 %v1366
      %1385 = vmatprep.subr.mxu0 0.0
      %1386 = vmatpush1.msra.mxu0 %v1367
      %1387 = vmatprep.subr.mxu0 0.0
      %1388 = vmatpush1.msra.mxu0 %v1368
      %1389 = vmatprep.subr.mxu0 0.0
      %1390 = vmatpush1.msra.mxu0 %v1369
      %1391 = vmatprep.subr.mxu0 0.0
      %1392 = vmatpush1.msra.mxu0 %v1370
      %1393 = vmatprep.subr.mxu0 0.0
      %1394 = vmatpush1.msra.mxu0 %v1371
      %1395 = vmatprep.subr.mxu0 0.0
      %1396 = vmatpush1.msra.mxu0 %v1372
      %1397 = vmatprep.subr.mxu0 0.0
      %1398 = vmatpush1.msra.mxu0 %v1373
      %1399 = vmatprep.subr.mxu0 0.0
      %1400 = vmatpush1.msra.mxu0 %v1374
      %1401 = vmatprep.subr.mxu0 0.0
      %1402 = vmatpush1.msra.mxu0 %v1375
      %1403 = vmatprep.subr.mxu0 0.0
      %1404 = vmatpush1.msra.mxu0 %v1376
      %1405 = vmatprep.subr.mxu0 0.0
      %1406 = vmatpush1.msra.mxu0 %v1377
      %1407 = vmatprep.subr.mxu0 0.0
      %1408 = vmatpush1.msra.mxu0 %v1378
      %1409 = vmatprep.subr.mxu0 0.0
      %1410 = vmatpush1.msra.mxu0 %v1379
      %1411 = vmatprep.subr.mxu0 0.0
      %1412 = vmatpush1.msra.mxu0 %v1380
      %1413 = vmatprep.subr.mxu0 0.0
      %1414 = vmatpush1.msra.mxu0 0.0
      %1415 = vmatprep.subr.mxu0 0.0
      %1416 = vmatpush1.msra.mxu0 0.0
      %1417 = vmatprep.subr.mxu0 0.0
      %1418 = vmatpush1.msra.mxu0 0.0
      %1419 = vmatprep.subr.mxu0 0.0
      %1420 = vmatpush1.msra.mxu0 0.0
      %1421 = vmatprep.subr.mxu0 0.0
      %1422 = vmatpush1.msra.mxu0 0.0
      %1423 = vmatprep.subr.mxu0 0.0
      %1424 = vmatpush1.msra.mxu0 0.0
      %1425 = vmatprep.subr.mxu0 0.0
      %1426 = vmatpush1.msra.mxu0 0.0
      %1427 = vmatprep.subr.mxu0 0.0
      %1428 = vmatpush1.msra.mxu0 0.0
      %1429 = vmatprep.subr.mxu0 0.0
      %1430 = vmatpush1.msra.mxu0 0.0
      %1431 = vmatprep.subr.mxu0 0.0
      %1432 = vmatpush1.msra.mxu0 0.0
      %1433 = vmatprep.subr.mxu0 0.0
      %1434 = vmatpush1.msra.mxu0 0.0
      %1435 = vmatprep.subr.mxu0 0.0
      %1436 = vmatpush1.msra.mxu0 0.0
      %1437 = vmatprep.subr.mxu0 0.0
      %1438 = vmatpush1.msra.mxu0 0.0
      %1439 = vmatprep.subr.mxu0 0.0
      %1440 = vmatpush1.msra.mxu0 0.0
      %1441 = vmatprep.subr.mxu0 0.0
      %1442 = vmatpush1.msra.mxu0 0.0
      %1443 = vmatprep.subr.mxu0 0.0
      %1444 = vmatpush1.msra.mxu0 0.0
      %1445 = vmatprep.mubr.f32.mxu0 0.0
      %1446 = vmatmul.mubr.f32.gmra.mrb[0].mxu0 %v1357
      %v1447 = vpop.f32.mrb[0].mxu0
      %v1448 = vadd.f32 0.0, %v1447
      %v1449 = vpop.f32.mrb[0].mxu0
      %1450 = vmatprep.mubr.f32.mxu0 0.0
      %1451 = vmatmul.mubr.f32.gmra.mrb[0].mxu0 %v1358
      %v1452 = vpop.f32.mrb[0].mxu0
      %v1453 = vadd.f32 0.0, %v1452
      %v1454 = vpop.f32.mrb[0].mxu0
      %1455 = vmatprep.mubr.f32.mxu0 0.0
      %1456 = vmatmul.mubr.f32.gmra.mrb[0].mxu0 %v1359
      %v1457 = vpop.f32.mrb[0].mxu0
      %v1458 = vadd.f32 0.0, %v1457
      %v1459 = vpop.f32.mrb[0].mxu0
      %1460 = vmatprep.mubr.f32.mxu0 0.0
      %1461 = vmatmul.mubr.f32.gmra.mrb[0].mxu0 %v1360
      %v1462 = vpop.f32.mrb[0].mxu0
      %v1463 = vadd.f32 0.0, %v1462
      %v1464 = vpop.f32.mrb[0].mxu0
      %1465 = vmatprep.mubr.f32.mxu0 0.0
      %1466 = vmatmul.mubr.f32.gmra.mrb[0].mxu0 %v1361
      %v1467 = vpop.f32.mrb[0].mxu0
      %v1468 = vadd.f32 0.0, %v1467
      %v1469 = vpop.f32.mrb[0].mxu0
      %1470 = vmatprep.mubr.f32.mxu0 0.0
      %1471 = vmatmul.mubr.f32.gmra.mrb[0].mxu0 %v1362
      %v1472 = vpop.f32.mrb[0].mxu0
      %v1473 = vadd.f32 0.0, %v1472
      %v1474 = vpop.f32.mrb[0].mxu0
      %1475 = vmatprep.mubr.f32.mxu0 0.0
      %1476 = vmatmul.mubr.f32.gmra.mrb[0].mxu0 %v1363
      %v1477 = vpop.f32.mrb[0].mxu0
      %v1478 = vadd.f32 0.0, %v1477
      %v1479 = vpop.f32.mrb[0].mxu0
      %1480 = vmatprep.mubr.f32.mxu0 0.0
      %1481 = vmatmul.mubr.f32.gmra.mrb[0].mxu0 %v1364
      %v1482 = vpop.f32.mrb[0].mxu0
      %v1483 = vadd.f32 0.0, %v1482
      %v1484 = vpop.f32.mrb[0].mxu0
      %1485 = vdwg.mxu0
      %1486 = vst.msk [vmem:[#allocation2] sm:$0xff] %vm1139, %v1448
      %1487 = vst.msk [vmem:[#allocation2 + $0x8] sm:$0xff] %vm1139, %v1453
      %1488 = vst.msk [vmem:[#allocation2 + $0x10] sm:$0xff] %vm1139, %v1458
      %1489 = vst.msk [vmem:[#allocation2 + $0x18] sm:$0xff] %vm1139, %v1463
      %1490 = vst.msk [vmem:[#allocation2 + $0x20] sm:$0xff] %vm1139, %v1468
      %1491 = vst.msk [vmem:[#allocation2 + $0x28] sm:$0xff] %vm1139, %v1473
      %1492 = vst.msk [vmem:[#allocation2 + $0x30] sm:$0xff] %vm1139, %v1478
      %1493 = vst.msk [vmem:[#allocation2 + $0x38] sm:$0xff] %vm1139, %v1483
      %v1494 = vld [vmem:[%s5] sm:$0xff]
      %v1495 = vld [vmem:[%s5 + $0x8] sm:$0xff]
      %v1496 = vld [vmem:[%s5 + $0x10] sm:$0xff]
      %v1497 = vld [vmem:[%s5 + $0x18] sm:$0xff]
      %v1498 = vld [vmem:[%s5 + $0x20] sm:$0x1]
      %v1499 = vld [vmem:[%s5 + $0x21] sm:$0x1]
      %v1500 = vld [vmem:[%s5 + $0x22] sm:$0x1]
      %v1501 = vld [vmem:[%s5 + $0x23] sm:$0x1]
      %v1502 = vld [vmem:[%s5 + $0x24] sm:$0x1]
      %v1503 = vld [vmem:[%s5 + $0x25] sm:$0x1]
      %v1504 = vld [vmem:[%s5 + $0x26] sm:$0x1]
      %v1505 = vlaneseq
      %v1506 = vshrl.u32 %v1505, 7
      %v1507 = vsub.s32 0, %v1506
      %v1508 = vrot.slane %v1498, %v1507
      %v1509 = vmul.f32 %v1448, %v1508
      %v1510 = vmul.f32 %v1453, %v1508
      %v1511 = vmul.f32 %v1458, %v1508
      %v1512 = vmul.f32 %v1463, %v1508
      %v1513 = vmul.f32 %v1468, %v1508
      %v1514 = vmul.f32 %v1473, %v1508
      %v1515 = vmul.f32 %v1478, %v1508
      %v1516 = vmul.f32 %v1483, %v1508
      %v1517 = vsel %vm1139, %v1509, 0.0
      %1518 = vadd.xlane.f32.xlu0 %v1517
      %v1519 = vpop.xlane.xlu0 %1518
      %v1520 = vsel %vm1139, %v1510, 0.0
      %1521 = vadd.xlane.f32.xlu0 %v1520
      %v1522 = vpop.xlane.xlu0 %1521
      %v1523 = vsel %vm1139, %v1511, 0.0
      %1524 = vadd.xlane.f32.xlu0 %v1523
      %v1525 = vpop.xlane.xlu0 %1524
      %v1526 = vsel %vm1139, %v1512, 0.0
      %1527 = vadd.xlane.f32.xlu0 %v1526
      %v1528 = vpop.xlane.xlu0 %1527
      %v1529 = vsel %vm1139, %v1513, 0.0
      %1530 = vadd.xlane.f32.xlu0 %v1529
      %v1531 = vpop.xlane.xlu0 %1530
      %v1532 = vsel %vm1139, %v1514, 0.0
      %1533 = vadd.xlane.f32.xlu0 %v1532
      %v1534 = vpop.xlane.xlu0 %1533
      %v1535 = vsel %vm1139, %v1515, 0.0
      %1536 = vadd.xlane.f32.xlu0 %v1535
      %v1537 = vpop.xlane.xlu0 %1536
      %v1538 = vsel %vm1139, %v1516, 0.0
      %1539 = vadd.xlane.f32.xlu0 %v1538
      %v1540 = vpop.xlane.xlu0 %1539
      %v1541 = vlaneseq
      %v1542 = vshrl.u32 %v1541, 7
      %v1543 = vsub.s32 0, %v1542
      %v1544 = vrot.slane %v1503, %v1543
      %v1545 = vadd.f32 %v1519, %v1544
      %v1546 = vadd.f32 %v1522, %v1544
      %v1547 = vadd.f32 %v1525, %v1544
      %v1548 = vadd.f32 %v1528, %v1544
      %v1549 = vadd.f32 %v1531, %v1544
      %v1550 = vadd.f32 %v1534, %v1544
      %v1551 = vadd.f32 %v1537, %v1544
      %v1552 = vadd.f32 %v1540, %v1544
      %vm1553 = vcmask 7168
      %v1554 = vsel %vm1553, %v1545, -inf
      %v1555 = vrot.slane %v1554, 4
      %v1556 = vmax.f32 %v1554, %v1555
      %v1557 = vrot.slane %v1556, 2
      %v1558 = vmax.f32 %v1556, %v1557
      %v1559 = vrot.slane %v1558, 1
      %v1560 = vmax.f32 %v1558, %v1559
      %v1561 = vsel %vm1553, %v1546, -inf
      %v1562 = vrot.slane %v1561, 4
      %v1563 = vmax.f32 %v1561, %v1562
      %v1564 = vrot.slane %v1563, 2
      %v1565 = vmax.f32 %v1563, %v1564
      %v1566 = vrot.slane %v1565, 1
      %v1567 = vmax.f32 %v1565, %v1566
      %v1568 = vsel %vm1553, %v1547, -inf
      %v1569 = vrot.slane %v1568, 4
      %v1570 = vmax.f32 %v1568, %v1569
      %v1571 = vrot.slane %v1570, 2
      %v1572 = vmax.f32 %v1570, %v1571
      %v1573 = vrot.slane %v1572, 1
      %v1574 = vmax.f32 %v1572, %v1573
      %v1575 = vsel %vm1553, %v1548, -inf
      %v1576 = vrot.slane %v1575, 4
      %v1577 = vmax.f32 %v1575, %v1576
      %v1578 = vrot.slane %v1577, 2
      %v1579 = vmax.f32 %v1577, %v1578
      %v1580 = vrot.slane %v1579, 1
      %v1581 = vmax.f32 %v1579, %v1580
      %v1582 = vsel %vm1553, %v1549, -inf
      %v1583 = vrot.slane %v1582, 4
      %v1584 = vmax.f32 %v1582, %v1583
      %v1585 = vrot.slane %v1584, 2
      %v1586 = vmax.f32 %v1584, %v1585
      %v1587 = vrot.slane %v1586, 1
      %v1588 = vmax.f32 %v1586, %v1587
      %v1589 = vsel %vm1553, %v1550, -inf
      %v1590 = vrot.slane %v1589, 4
      %v1591 = vmax.f32 %v1589, %v1590
      %v1592 = vrot.slane %v1591, 2
      %v1593 = vmax.f32 %v1591, %v1592
      %v1594 = vrot.slane %v1593, 1
      %v1595 = vmax.f32 %v1593, %v1594
      %v1596 = vsel %vm1553, %v1551, -inf
      %v1597 = vrot.slane %v1596, 4
      %v1598 = vmax.f32 %v1596, %v1597
      %v1599 = vrot.slane %v1598, 2
      %v1600 = vmax.f32 %v1598, %v1599
      %v1601 = vrot.slane %v1600, 1
      %v1602 = vmax.f32 %v1600, %v1601
      %v1603 = vsel %vm1553, %v1552, -inf
      %v1604 = vrot.slane %v1603, 4
      %v1605 = vmax.f32 %v1603, %v1604
      %v1606 = vrot.slane %v1605, 2
      %v1607 = vmax.f32 %v1605, %v1606
      %v1608 = vrot.slane %v1607, 1
      %v1609 = vmax.f32 %v1607, %v1608
      %v1610 = vsub.f32 %v1545, %v1560
      %v1611 = vsub.f32 %v1546, %v1567
      %v1612 = vsub.f32 %v1547, %v1574
      %v1613 = vsub.f32 %v1548, %v1581
      %v1614 = vsub.f32 %v1549, %v1588
      %v1615 = vsub.f32 %v1550, %v1595
      %v1616 = vsub.f32 %v1551, %v1602
      %v1617 = vsub.f32 %v1552, %v1609
      %v1618 = vmul.f32 %v1610, 1.442695
      %v1619 = vpow.pop %v1618
      %v1620 = vmul.f32 %v1611, 1.442695
      %v1621 = vpow.pop %v1620
      %v1622 = vmul.f32 %v1612, 1.442695
      %v1623 = vpow.pop %v1622
      %v1624 = vmul.f32 %v1613, 1.442695
      %v1625 = vpow.pop %v1624
      %v1626 = vmul.f32 %v1614, 1.442695
      %v1627 = vpow.pop %v1626
      %v1628 = vmul.f32 %v1615, 1.442695
      %v1629 = vpow.pop %v1628
      %v1630 = vmul.f32 %v1616, 1.442695
      %v1631 = vpow.pop %v1630
      %v1632 = vmul.f32 %v1617, 1.442695
      %v1633 = vpow.pop %v1632
      %v1634 = vsel %vm1553, %v1619, 0.0
      %v1635 = vrot.slane %v1634, 4
      %v1636 = vadd.f32 %v1634, %v1635
      %v1637 = vrot.slane %v1636, 2
      %v1638 = vadd.f32 %v1636, %v1637
      %v1639 = vrot.slane %v1638, 1
      %v1640 = vadd.f32 %v1638, %v1639
      %v1641 = vsel %vm1553, %v1621, 0.0
      %v1642 = vrot.slane %v1641, 4
      %v1643 = vadd.f32 %v1641, %v1642
      %v1644 = vrot.slane %v1643, 2
      %v1645 = vadd.f32 %v1643, %v1644
      %v1646 = vrot.slane %v1645, 1
      %v1647 = vadd.f32 %v1645, %v1646
      %v1648 = vsel %vm1553, %v1623, 0.0
      %v1649 = vrot.slane %v1648, 4
      %v1650 = vadd.f32 %v1648, %v1649
      %v1651 = vrot.slane %v1650, 2
      %v1652 = vadd.f32 %v1650, %v1651
      %v1653 = vrot.slane %v1652, 1
      %v1654 = vadd.f32 %v1652, %v1653
      %v1655 = vsel %vm1553, %v1625, 0.0
      %v1656 = vrot.slane %v1655, 4
      %v1657 = vadd.f32 %v1655, %v1656
      %v1658 = vrot.slane %v1657, 2
      %v1659 = vadd.f32 %v1657, %v1658
      %v1660 = vrot.slane %v1659, 1
      %v1661 = vadd.f32 %v1659, %v1660
      %v1662 = vsel %vm1553, %v1627, 0.0
      %v1663 = vrot.slane %v1662, 4
      %v1664 = vadd.f32 %v1662, %v1663
      %v1665 = vrot.slane %v1664, 2
      %v1666 = vadd.f32 %v1664, %v1665
      %v1667 = vrot.slane %v1666, 1
      %v1668 = vadd.f32 %v1666, %v1667
      %v1669 = vsel %vm1553, %v1629, 0.0
      %v1670 = vrot.slane %v1669, 4
      %v1671 = vadd.f32 %v1669, %v1670
      %v1672 = vrot.slane %v1671, 2
      %v1673 = vadd.f32 %v1671, %v1672
      %v1674 = vrot.slane %v1673, 1
      %v1675 = vadd.f32 %v1673, %v1674
      %v1676 = vsel %vm1553, %v1631, 0.0
      %v1677 = vrot.slane %v1676, 4
      %v1678 = vadd.f32 %v1676, %v1677
      %v1679 = vrot.slane %v1678, 2
      %v1680 = vadd.f32 %v1678, %v1679
      %v1681 = vrot.slane %v1680, 1
      %v1682 = vadd.f32 %v1680, %v1681
      %v1683 = vsel %vm1553, %v1633, 0.0
      %v1684 = vrot.slane %v1683, 4
      %v1685 = vadd.f32 %v1683, %v1684
      %v1686 = vrot.slane %v1685, 2
      %v1687 = vadd.f32 %v1685, %v1686
      %v1688 = vrot.slane %v1687, 1
      %v1689 = vadd.f32 %v1687, %v1688
      %v1690 = vrcp.pop %v1640
      %v1691 = vrcp.pop %v1647
      %v1692 = vrcp.pop %v1654
      %v1693 = vrcp.pop %v1661
      %v1694 = vrcp.pop %v1668
      %v1695 = vrcp.pop %v1675
      %v1696 = vrcp.pop %v1682
      %v1697 = vrcp.pop %v1689
      %v1698 = vmul.f32 %v1619, %v1690
      %v1699 = vmul.f32 %v1621, %v1691
      %v1700 = vmul.f32 %v1623, %v1692
      %v1701 = vmul.f32 %v1625, %v1693
      %v1702 = vmul.f32 %v1627, %v1694
      %v1703 = vmul.f32 %v1629, %v1695
      %v1704 = vmul.f32 %v1631, %v1696
      %v1705 = vmul.f32 %v1633, %v1697
      %1707 = vset.pattern.permute.xlu0 0
      %1708 = vperm.xlu0 %1707, %v1698
      %v1709 = vpop.permute.xlu0 %1708
      %1712 = vset.pattern.permute.xlu0 0
      %1713 = vperm.xlu0 %1712, %v1699
      %v1714 = vpop.permute.xlu0 %1713
      %1717 = vset.pattern.permute.xlu0 0
      %1718 = vperm.xlu0 %1717, %v1700
      %v1719 = vpop.permute.xlu0 %1718
      %1722 = vset.pattern.permute.xlu0 0
      %1723 = vperm.xlu0 %1722, %v1701
      %v1724 = vpop.permute.xlu0 %1723
      %1727 = vset.pattern.permute.xlu0 0
      %1728 = vperm.xlu0 %1727, %v1702
      %v1729 = vpop.permute.xlu0 %1728
      %1732 = vset.pattern.permute.xlu0 0
      %1733 = vperm.xlu0 %1732, %v1703
      %v1734 = vpop.permute.xlu0 %1733
      %1737 = vset.pattern.permute.xlu0 0
      %1738 = vperm.xlu0 %1737, %v1704
      %v1739 = vpop.permute.xlu0 %1738
      %1742 = vset.pattern.permute.xlu0 0
      %1743 = vperm.xlu0 %1742, %v1705
      %v1744 = vpop.permute.xlu0 %1743
      %v1746 = vmul.f32 %v1709, %v1448
      %v1747 = vmul.f32 %v1714, %v1453
      %v1748 = vmul.f32 %v1719, %v1458
      %v1749 = vmul.f32 %v1724, %v1463
      %v1750 = vmul.f32 %v1729, %v1468
      %v1751 = vmul.f32 %v1734, %v1473
      %v1752 = vmul.f32 %v1739, %v1478
      %v1753 = vmul.f32 %v1744, %v1483
      %v1754 = vsel %vm1139, %v1746, 0.0
      %v1755 = vrot.slane %v1754, 4
      %v1756 = vadd.f32 %v1754, %v1755
      %v1757 = vrot.slane %v1756, 2
      %v1758 = vadd.f32 %v1756, %v1757
      %v1759 = vrot.slane %v1758, 1
      %v1760 = vadd.f32 %v1758, %v1759
      %v1761 = vsel %vm1139, %v1747, 0.0
      %v1762 = vrot.slane %v1761, 4
      %v1763 = vadd.f32 %v1761, %v1762
      %v1764 = vrot.slane %v1763, 2
      %v1765 = vadd.f32 %v1763, %v1764
      %v1766 = vrot.slane %v1765, 1
      %v1767 = vadd.f32 %v1765, %v1766
      %v1768 = vsel %vm1139, %v1748, 0.0
      %v1769 = vrot.slane %v1768, 4
      %v1770 = vadd.f32 %v1768, %v1769
      %v1771 = vrot.slane %v1770, 2
      %v1772 = vadd.f32 %v1770, %v1771
      %v1773 = vrot.slane %v1772, 1
      %v1774 = vadd.f32 %v1772, %v1773
      %v1775 = vsel %vm1139, %v1749, 0.0
      %v1776 = vrot.slane %v1775, 4
      %v1777 = vadd.f32 %v1775, %v1776
      %v1778 = vrot.slane %v1777, 2
      %v1779 = vadd.f32 %v1777, %v1778
      %v1780 = vrot.slane %v1779, 1
      %v1781 = vadd.f32 %v1779, %v1780
      %v1782 = vsel %vm1139, %v1750, 0.0
      %v1783 = vrot.slane %v1782, 4
      %v1784 = vadd.f32 %v1782, %v1783
      %v1785 = vrot.slane %v1784, 2
      %v1786 = vadd.f32 %v1784, %v1785
      %v1787 = vrot.slane %v1786, 1
      %v1788 = vadd.f32 %v1786, %v1787
      %v1789 = vsel %vm1139, %v1751, 0.0
      %v1790 = vrot.slane %v1789, 4
      %v1791 = vadd.f32 %v1789, %v1790
      %v1792 = vrot.slane %v1791, 2
      %v1793 = vadd.f32 %v1791, %v1792
      %v1794 = vrot.slane %v1793, 1
      %v1795 = vadd.f32 %v1793, %v1794
      %v1796 = vsel %vm1139, %v1752, 0.0
      %v1797 = vrot.slane %v1796, 4
      %v1798 = vadd.f32 %v1796, %v1797
      %v1799 = vrot.slane %v1798, 2
      %v1800 = vadd.f32 %v1798, %v1799
      %v1801 = vrot.slane %v1800, 1
      %v1802 = vadd.f32 %v1800, %v1801
      %v1803 = vsel %vm1139, %v1753, 0.0
      %v1804 = vrot.slane %v1803, 4
      %v1805 = vadd.f32 %v1803, %v1804
      %v1806 = vrot.slane %v1805, 2
      %v1807 = vadd.f32 %v1805, %v1806
      %v1808 = vrot.slane %v1807, 1
      %v1809 = vadd.f32 %v1807, %v1808
      %v1810 = vlaneseq
      %v1811 = vshrl.u32 %v1810, 7
      %v1812 = vsub.s32 0, %v1811
      %v1813 = vrot.slane %v1499, %v1812
      %vm1822 = vcmask 1041409
      %v1823 = vsel %vm1822, %v1767, %v1760
      %vm1824 = vcmask 1042434
      %v1825 = vsel %vm1824, %v1774, %v1823
      %vm1826 = vcmask 1043459
      %v1827 = vsel %vm1826, %v1781, %v1825
      %vm1828 = vcmask 1044484
      %v1829 = vsel %vm1828, %v1788, %v1827
      %vm1830 = vcmask 1045509
      %v1831 = vsel %vm1830, %v1795, %v1829
      %vm1832 = vcmask 1046534
      %v1833 = vsel %vm1832, %v1802, %v1831
      %vm1834 = vcmask 1047559
      %v1835 = vsel %vm1834, %v1809, %v1833
      %v1836 = vsel %vm1139, %v1835, 0
      %1838 = vmatprep.subr.mxu0 0.0
      %1839 = vmatpush1.msra.mxu0 %v1494
      %1840 = vmatprep.subr.mxu0 0.0
      %1841 = vmatpush1.msra.mxu0 %v1495
      %1842 = vmatprep.subr.mxu0 0.0
      %1843 = vmatpush1.msra.mxu0 %v1496
      %1844 = vmatprep.subr.mxu0 0.0
      %1845 = vmatpush1.msra.mxu0 %v1497
      %1846 = vmatprep.subr.mxu0 0.0
      %1847 = vmatpush1.msra.mxu0 0.0
      %1848 = vmatprep.subr.mxu0 0.0
      %1849 = vmatpush1.msra.mxu0 0.0
      %1850 = vmatprep.subr.mxu0 0.0
      %1851 = vmatpush1.msra.mxu0 0.0
      %1852 = vmatprep.subr.mxu0 0.0
      %1853 = vmatpush1.msra.mxu0 0.0
      %1854 = vmatprep.subr.mxu0 0.0
      %1855 = vmatpush1.msra.mxu0 0.0
      %1856 = vmatprep.subr.mxu0 0.0
      %1857 = vmatpush1.msra.mxu0 0.0
      %1858 = vmatprep.subr.mxu0 0.0
      %1859 = vmatpush1.msra.mxu0 0.0
      %1860 = vmatprep.subr.mxu0 0.0
      %1861 = vmatpush1.msra.mxu0 0.0
      %1862 = vmatprep.subr.mxu0 0.0
      %1863 = vmatpush1.msra.mxu0 0.0
      %1864 = vmatprep.subr.mxu0 0.0
      %1865 = vmatpush1.msra.mxu0 0.0
      %1866 = vmatprep.subr.mxu0 0.0
      %1867 = vmatpush1.msra.mxu0 0.0
      %1868 = vmatprep.subr.mxu0 0.0
      %1869 = vmatpush1.msra.mxu0 0.0
      %1870 = vmatprep.subr.mxu0 0.0
      %1871 = vmatpush1.msra.mxu0 0.0
      %1872 = vmatprep.subr.mxu0 0.0
      %1873 = vmatpush1.msra.mxu0 0.0
      %1874 = vmatprep.subr.mxu0 0.0
      %1875 = vmatpush1.msra.mxu0 0.0
      %1876 = vmatprep.subr.mxu0 0.0
      %1877 = vmatpush1.msra.mxu0 0.0
      %1878 = vmatprep.subr.mxu0 0.0
      %1879 = vmatpush1.msra.mxu0 0.0
      %1880 = vmatprep.subr.mxu0 0.0
      %1881 = vmatpush1.msra.mxu0 0.0
      %1882 = vmatprep.subr.mxu0 0.0
      %1883 = vmatpush1.msra.mxu0 0.0
      %1884 = vmatprep.subr.mxu0 0.0
      %1885 = vmatpush1.msra.mxu0 0.0
      %1886 = vmatprep.subr.mxu0 0.0
      %1887 = vmatpush1.msra.mxu0 0.0
      %1888 = vmatprep.subr.mxu0 0.0
      %1889 = vmatpush1.msra.mxu0 0.0
      %1890 = vmatprep.subr.mxu0 0.0
      %1891 = vmatpush1.msra.mxu0 0.0
      %1892 = vmatprep.subr.mxu0 0.0
      %1893 = vmatpush1.msra.mxu0 0.0
      %1894 = vmatprep.subr.mxu0 0.0
      %1895 = vmatpush1.msra.mxu0 0.0
      %1896 = vmatprep.subr.mxu0 0.0
      %1897 = vmatpush1.msra.mxu0 0.0
      %1898 = vmatprep.subr.mxu0 0.0
      %1899 = vmatpush1.msra.mxu0 0.0
      %1900 = vmatprep.subr.mxu0 0.0
      %1901 = vmatpush1.msra.mxu0 0.0
      %1902 = vmatprep.mubr.f32.mxu0 0.0
      %1903 = vmatmul.mubr.f32.gmra.mrb[0].mxu0 %v1836
      %v1904 = vpop.f32.mrb[0].mxu0
      %v1905 = vadd.f32 %v1813, %v1904
      %v1906 = vpop.f32.mrb[0].mxu0
      %1907 = vdwg.mxu0
      %v1908 = vmax.f32 %v1905, 0.0
      %v1909 = vsel %vm1139, %v1908, 0.0
      %1910 = vadd.xlane.f32.xlu0 %v1909
      %v1911 = vpop.xlane.xlu0 %1910
      %v1912 = vrcp.pop 32.0
      %v1913 = vmul.f32 %v1911, %v1912
      %v1914 = vsub.f32 %v1908, %v1913
      %v1915 = vmul.f32 %v1914, %v1914
      %v1916 = vsel %vm1139, %v1915, 0.0
      %1917 = vadd.xlane.f32.xlu0 %v1916
      %v1918 = vpop.xlane.xlu0 %1917
      %v1919 = vmul.f32 %v1918, %v1912
      %v1920 = vadd.f32 %v1919, 1e-05
      %v1921 = vrsqrt.pop %v1920
      %v1922 = vmul.f32 %v1914, %v1921
      %v1923 = vlaneseq
      %v1924 = vshrl.u32 %v1923, 7
      %v1925 = vsub.s32 0, %v1924
      %v1926 = vrot.slane %v1500, %v1925
      %v1927 = vmul.f32 %v1922, %v1926
      %v1928 = vlaneseq
      %v1929 = vshrl.u32 %v1928, 7
      %v1930 = vsub.s32 0, %v1929
      %v1931 = vrot.slane %v1501, %v1930
      %v1932 = vadd.f32 %v1927, %v1931
      %v1933 = vlaneseq
      %v1934 = vshrl.u32 %v1933, 7
      %v1935 = vsub.s32 0, %v1934
      %v1936 = vrot.slane %v1502, %v1935
      %v1937 = vmul.f32 %v1932, %v1936
      %v1938 = vsel %vm1139, %v1937, 0.0
      %1939 = vadd.xlane.f32.xlu0 %v1938
      %v1940 = vpop.xlane.xlu0 %1939
      %v1941 = vlaneseq
      %v1942 = vshrl.u32 %v1941, 7
      %v1943 = vsub.s32 0, %v1942
      %v1944 = vrot.slane %v1504, %v1943
      %v1945 = vadd.f32 %v1940, %v1944
      %v1946 = vlaneseq
      %v1947 = vand.u32 %v1946, 127
      %v1948 = vstv %s22
      %vm1949 = vcmp.eq.s32.totalorder %v1947, %v1948
      %v1950 = vld [vmem:[%s278] sm:$0xff]
      %1952 = vset.pattern.permute.xlu0 0
      %1953 = vperm.xlu0 %1952, %v1945
      %v1954 = vpop.permute.xlu0 %1953
      %v1956 = vsel %vm1949, %v1954, %v1950
      %vm1957 = vcmask 23552
      %1958 = vst.msk [vmem:[%s278] sm:$0xff] %vm1957, %v1956
      %p1959 = scmp.lt.s32.totalorder %s21, 0
      %s1960 = scalar_select %p1959, %s21, 0
      %s1961 = smul.addr %s1960, 8
      %s1962 = scalar_lea.vmem %s6, %s1961
      // Predicated region
      $region49: #{trompt_forward.1} parent=43 // pred_check
        %p1963 = pneg %p183
      $region50: #{trompt_forward.1} parent=43 // pred_check_branch
        %1965 = sbr.rel (%p1963) target = $region52
      $region51: #{trompt_forward.1} parent=43 // pred_region
        _
      $region52: #{trompt_forward.1} parent=43 // pred_fallthru
        _
      // Predicated region
      $region53: #{trompt_forward.1} parent=43 // pred_check
        %p1966 = pneg %p183
      $region54: #{trompt_forward.1} parent=43 // pred_check_branch
        %1968 = sbr.rel (%p1966) target = $region56
      $region55: #{trompt_forward.1} parent=43 // pred_region
        %p1969 = scmp.lt.s32.totalorder %s21, 0
        %s1970 = scalar_select %p1969, %s21, 0
        %s1971 = smul.addr %s1970, 8
        %s1972 = scalar_lea.vmem %s6, %s1971
      $region56: #{trompt_forward.1} parent=43 // pred_fallthru
        _
    $region44: #{trompt_forward.1} parent=5 // pred_fallthru
      _
    %p1973 = scmp.le.s32.totalorder 2, %s12
    // Predicated region
    $region57: #{trompt_forward.1} parent=5 // pred_check
      %p1974 = pneg %p1973
    $region58: #{trompt_forward.1} parent=5 // pred_check_branch
      %1976 = sbr.rel (%p1974) target = $region60
    $region59: #{trompt_forward.1} parent=5 // pred_region
      %s1977 = ssub.s32 %s12, 2
    $region60: #{trompt_forward.1} parent=5 // pred_fallthru
      _
  $region6: #{trompt_forward.1} parent=0 // loop_footer
    %s16 = sadd.s32 1, %s12
  $region7: #{trompt_forward.1} parent=0 // loop_footer_branch
    %11 = sbr.rel target = $region3
  $region8: #{trompt_forward.1} parent=0 // loop_exit
    _

</llo_original>
